<compile_context>
chip_gen: v5e
topology: v5e:2x2
jax: 0.10.0
libtpu: 0.0.40
codegen_flags: <defaults>
</compile_context>

<pallas_src>
import functools
import math

import jax
import jax.numpy as jnp
from jax.experimental import pallas as pl
from jax.experimental.pallas import tpu as pltpu


def seggru_kernel(x_ref, wih_t_ref, abig_ref, bgi_ref, wpack_ref, bmisc_ref,
                  out_ref, *, hidden_size, pre_len, batch_padded, new_seq):
    H = hidden_size
    G = 3 * H
    Bp = batch_padded
    S2 = new_seq

    wih_t = wih_t_ref[...]                    # (I, 3H)
    abig = abig_ref[...]                      # (S2*Bp, Bp*S)  block-diagonal fc1
    b_gi = bgi_ref[...]                       # (S2*Bp, 3H)    combined gi bias
    whh_t = wpack_ref[:, :G]                  # (H, 3H)
    w2 = wpack_ref[:, :2 * G]                 # (H, 6H)  [W_hh^T | W_comb]
    fc2_wt = wpack_ref[:, 2 * G:]             # (H, I)
    bhh_n = bmisc_ref[:, 2 * H:G]             # (1, H)   n-third of b_hh
    b2 = bmisc_ref[:, :2 * G]                 # (1, 6H)  [b_hh | b_comb]
    fc2_b = bmisc_ref[:, 2 * G:]              # (1, I)

    # ---- Hoisted input path (off the serial critical path; 2-D, lane-dense) --
    zx = jnp.dot(x_ref[...], wih_t, preferred_element_type=jnp.float32)     # (Bp*S, 3H)
    gi_all = jnp.dot(abig, zx, preferred_element_type=jnp.float32) + b_gi   # (S2*Bp, 3H)

    # ---- Phase 1: serial GRU; only h @ W_hh^T + gate math per step ----------
    h = jnp.zeros((Bp, H), dtype=jnp.float32)
    tail = []
    for t in range(S2):                       # S2 = 16: static unroll
        gi = gi_all[t * Bp:(t + 1) * Bp, :]                                  # aligned slice
        gh = jnp.dot(h, whh_t, preferred_element_type=jnp.float32)          # (Bp, 3H)
        r = jax.nn.sigmoid(gi[:, :H] + gh[:, :H])
        zg = jax.nn.sigmoid(gi[:, H:2 * H] + gh[:, H:2 * H])
        n = jnp.tanh(gi[:, 2 * H:] + r * (gh[:, 2 * H:] + bhh_n))
        h = (1.0 - zg) * n + zg * h
        if t >= S2 - pre_len:
            tail.append(h)                    # tail states stay in vregs

    # ---- Phase 2: fully vectorized over the pre_len tail states -------------
    h_tail = jnp.concatenate(tail, axis=0)                                   # (pre_len*Bp, H)
    g2 = jnp.dot(h_tail, w2, preferred_element_type=jnp.float32) + b2        # (pre_len*Bp, 6H)
    gh2 = g2[:, :G]                           # h_tail @ W_hh^T + b_hh
    gi2 = g2[:, G:]                           # fc2(h_tail) @ W_ih^T + b_ih (folded)
    r2 = jax.nn.sigmoid(gi2[:, :H] + gh2[:, :H])
    z2 = jax.nn.sigmoid(gi2[:, H:2 * H] + gh2[:, H:2 * H])
    n2 = jnp.tanh(gi2[:, 2 * H:] + r2 * gh2[:, 2 * H:])
    new_h = (1.0 - z2) * n2 + z2 * h_tail                                    # (pre_len*Bp, H)

    out = jnp.dot(new_h, fc2_wt, preferred_element_type=jnp.float32) + fc2_b # (pre_len*Bp, I)
    out_ref[...] = out.astype(out_ref.dtype)                                 # single 2-D store


def seggru_forward(x, params, *, hidden_size, pre_len):
    B, S, I = x.shape
    H = hidden_size
    G = 3 * H
    S2 = params['fc1_w'].shape[0]
    assert pre_len <= S2, "pre_len must not exceed the fc1-expanded sequence length"
    f32 = jnp.float32

    fc1_w = params['fc1_w'].astype(f32)       # (S2, S)
    fc1_b = params['fc1_b'].astype(f32)       # (S2,)
    wih   = params['wih'].astype(f32)         # (3H, I)
    whh   = params['whh'].astype(f32)         # (3H, H)
    bih   = params['bih'].astype(f32)         # (3H,)
    bhh   = params['bhh'].astype(f32)         # (3H,)
    fc2_w = params['fc2_w'].astype(f32)       # (I, H)
    fc2_b = params['fc2_b'].astype(f32)       # (I,)

    wih_t  = wih.T                            # (I, 3H)
    whh_t  = whh.T                            # (H, 3H)
    fc2_wt = fc2_w.T                          # (H, I)
    wcomb  = fc2_wt @ wih_t                   # (H, 3H): fc2 folded into W_ih (phase 2)
    bcomb  = fc2_b @ wih_t + bih              # (3H,)

    # Pad batch to a full 8-sublane tile: free on the serial path, and keeps
    # every in-kernel slice / concat tile-aligned.
    Bp = ((B + 7) // 8) * 8
    x_pad = jnp.pad(x.astype(f32), ((0, Bp - B), (0, 0), (0, 0)))
    x2d = x_pad.reshape(Bp * S, I)            # contiguous reshape; no transpose anywhere

    # Block-diagonal fc1 so the time mixing is one lane-dense 2-D matmul:
    #   abig[t'*Bp + b, b*S + t] = fc1_w[t', t]
    abig = (fc1_w[:, None, None, :] *
            jnp.eye(Bp, dtype=f32)[None, :, :, None]).reshape(S2 * Bp, Bp * S)

    # Combined gi bias: fc1 bias pushed through W_ih, plus b_ih, plus the r/z
    # thirds of b_hh (pure adds); the n-third of b_hh stays inside the loop.
    bhh_rz = jnp.concatenate([bhh[:2 * H], jnp.zeros((H,), f32)])
    b_gi = jnp.outer(fc1_b, wih.sum(axis=1)) + bih + bhh_rz        # (S2, 3H)
    b_gi = jnp.repeat(b_gi, Bp, axis=0)                            # (S2*Bp, 3H)

    # Packed weight / bias refs (6 kernel inputs instead of 11).
    w_pack = jnp.concatenate([whh_t, wcomb, fc2_wt], axis=1)            # (H, 6H+I)
    b_misc = jnp.concatenate([bhh, bcomb, fc2_b]).reshape(1, 2 * G + I)  # (1, 6H+I)

    kernel = functools.partial(seggru_kernel, hidden_size=H, pre_len=pre_len,
                               batch_padded=Bp, new_seq=S2)
    vmem = pl.BlockSpec(memory_space=pltpu.MemorySpace.VMEM)
    out2d = pl.pallas_call(
        kernel,
        out_shape=jax.ShapeDtypeStruct((pre_len * Bp, I), f32),
        in_specs=[vmem] * 6,
        out_specs=vmem,
    )(x2d, wih_t, abig, b_gi, w_pack, b_misc)

    # Rows are ordered (tail step, padded batch): restore (B, pre_len, I).
    return out2d.reshape(pre_len, Bp, I)[:, :B, :].swapaxes(0, 1)


def seggru_reference(x, p, *, hidden_size, pre_len):
    """Pure-JAX mirror of the PyTorch forward, for correctness checking."""
    H = hidden_size

    def fc1(t):
        return t @ p['fc1_w'].T + p['fc1_b']

    def fc2(t):
        return t @ p['fc2_w'].T + p['fc2_b']

    def gru(xi, h):
        gi = xi @ p['wih'].T + p['bih']
        gh = h @ p['whh'].T + p['bhh']
        r = jax.nn.sigmoid(gi[:, :H] + gh[:, :H])
        z = jax.nn.sigmoid(gi[:, H:2 * H] + gh[:, H:2 * H])
        n = jnp.tanh(gi[:, 2 * H:] + r * gh[:, 2 * H:])
        return (1.0 - z) * n + z * h

    xn = jnp.swapaxes(fc1(jnp.swapaxes(x, 1, 2)), 1, 2)   # (B, S2, I)
    B, S2, I = xn.shape
    h = jnp.zeros((B, H), dtype=jnp.float32)
    hs = []
    for i in range(S2):
        h = gru(xn[:, i, :], h)
        hs.append(h)
    hs = hs[-pre_len:]
    outs = []
    for i in range(pre_len):
        new_h = gru(fc2(hs[i]), hs[i])
        outs.append(fc2(new_h))
    return jnp.stack(outs, axis=1)


if __name__ == "__main__":
    # Small config consistent with the module:
    #   window_size (seq) = 8, input_size = 4, m = 2 -> new_seq = 16,
    #   hidden_size = 32, pre_len = 4, batch = 2.
    B, S, I = 2, 8, 4
    M = 2.0
    S2 = int(S * M)
    H = 32
    PRE_LEN = 4

    key = jax.random.PRNGKey(0)
    ks = jax.random.split(key, 9)

    def uni(k, shape, bound):
        return jax.random.uniform(k, shape, jnp.float32, -bound, bound)

    b_gru = 1.0 / math.sqrt(H)
    b_fc1 = 1.0 / math.sqrt(S)
    b_fc2 = 1.0 / math.sqrt(H)

    params = {
        'fc1_w': uni(ks[0], (S2, S), b_fc1),
        'fc1_b': uni(ks[1], (S2,), b_fc1),
        'wih':   uni(ks[2], (3 * H, I), b_gru),
        'whh':   uni(ks[3], (3 * H, H), b_gru),
        'bih':   uni(ks[4], (3 * H,), b_gru),
        'bhh':   uni(ks[5], (3 * H,), b_gru),
        'fc2_w': uni(ks[6], (I, H), b_fc2),
        'fc2_b': uni(ks[7], (I,), b_fc2),
    }
    x = jax.random.normal(ks[8], (B, S, I), jnp.float32)

    out = seggru_forward(x, params, hidden_size=H, pre_len=PRE_LEN)
    out = jax.block_until_ready(out)

    ref = seggru_reference(x, params, hidden_size=H, pre_len=PRE_LEN)
    assert out.shape == (B, PRE_LEN, I), out.shape
    assert jnp.allclose(out, ref, atol=1e-4, rtol=1e-4), \
        f"max abs err = {jnp.max(jnp.abs(out - ref))}"

    print("KERNEL_OK")
</pallas_src>

<mosaic_0001>
module attributes {stable_mosaic.version = 11 : i64} {
  func.func @seggru_kernel(%arg0: memref<64x4xf32, #tpu.memory_space<vmem>>, %arg1: memref<4x96xf32, #tpu.memory_space<vmem>>, %arg2: memref<128x64xf32, #tpu.memory_space<vmem>>, %arg3: memref<128x96xf32, #tpu.memory_space<vmem>>, %arg4: memref<32x196xf32, #tpu.memory_space<vmem>>, %arg5: memref<1x196xf32, #tpu.memory_space<vmem>>, %arg6: memref<32x4xf32, #tpu.memory_space<vmem>>) attributes {dimension_semantics = [], scalar_prefetch = 0 : i64, scratch_operands = 0 : i64, tpu.core_type = #tpu.core_type<tc>} {
    %c0 = arith.constant 0 : index
    %c0_0 = arith.constant 0 : index
    %0 = vector.load %arg1[%c0, %c0_0] : memref<4x96xf32, #tpu.memory_space<vmem>>, vector<4x96xf32>
    %c0_1 = arith.constant 0 : index
    %c0_2 = arith.constant 0 : index
    %1 = vector.load %arg2[%c0_1, %c0_2] : memref<128x64xf32, #tpu.memory_space<vmem>>, vector<128x64xf32>
    %c0_3 = arith.constant 0 : index
    %c0_4 = arith.constant 0 : index
    %2 = vector.load %arg3[%c0_3, %c0_4] : memref<128x96xf32, #tpu.memory_space<vmem>>, vector<128x96xf32>
    %c0_5 = arith.constant 0 : index
    %c0_6 = arith.constant 0 : index
    %3 = vector.load %arg4[%c0_5, %c0_6] : memref<32x196xf32, #tpu.memory_space<vmem>>, vector<32x96xf32>
    %c0_7 = arith.constant 0 : index
    %c0_8 = arith.constant 0 : index
    %4 = vector.load %arg4[%c0_7, %c0_8] : memref<32x196xf32, #tpu.memory_space<vmem>>, vector<32x192xf32>
    %c0_9 = arith.constant 0 : index
    %c192 = arith.constant 192 : index
    %5 = vector.load %arg4[%c0_9, %c192] : memref<32x196xf32, #tpu.memory_space<vmem>>, vector<32x4xf32>
    %c0_10 = arith.constant 0 : index
    %c64 = arith.constant 64 : index
    %6 = vector.load %arg5[%c0_10, %c64] : memref<1x196xf32, #tpu.memory_space<vmem>>, vector<1x32xf32>
    %c0_11 = arith.constant 0 : index
    %c0_12 = arith.constant 0 : index
    %7 = vector.load %arg5[%c0_11, %c0_12] : memref<1x196xf32, #tpu.memory_space<vmem>>, vector<1x192xf32>
    %c0_13 = arith.constant 0 : index
    %c192_14 = arith.constant 192 : index
    %8 = vector.load %arg5[%c0_13, %c192_14] : memref<1x196xf32, #tpu.memory_space<vmem>>, vector<1x4xf32>
    %c0_15 = arith.constant 0 : index
    %c0_16 = arith.constant 0 : index
    %9 = vector.load %arg0[%c0_15, %c0_16] : memref<64x4xf32, #tpu.memory_space<vmem>>, vector<64x4xf32>
    %cst = arith.constant dense<0.000000e+00> : vector<64x96xf32>
    %10 = tpu.matmul %9, %0, %cst {dimension_numbers = #tpu.dot_dimension_numbers<[1], [0], [0], [1], [0, 0, 1, 1], [], []>} : vector<64x4xf32>, vector<4x96xf32>, vector<64x96xf32> -> vector<64x96xf32>
    %cst_17 = arith.constant dense<0.000000e+00> : vector<128x96xf32>
    %11 = tpu.matmul %1, %10, %cst_17 {dimension_numbers = #tpu.dot_dimension_numbers<[1], [0], [0], [1], [0, 0, 1, 1], [], []>} : vector<128x64xf32>, vector<64x96xf32>, vector<128x96xf32> -> vector<128x96xf32>
    %12 = arith.addf %11, %2 : vector<128x96xf32>
    %cst_18 = arith.constant 0.000000e+00 : f32
    %13 = vector.broadcast %cst_18 : f32 to vector<8x32xf32>
    %14 = vector.extract_strided_slice %12 {offsets = [0, 0], sizes = [8, 96], strides = [1, 1]} : vector<128x96xf32> to vector<8x96xf32>
    %cst_19 = arith.constant dense<0.000000e+00> : vector<8x96xf32>
    %15 = tpu.matmul %13, %3, %cst_19 {dimension_numbers = #tpu.dot_dimension_numbers<[1], [0], [0], [1], [0, 0, 1, 1], [], []>} : vector<8x32xf32>, vector<32x96xf32>, vector<8x96xf32> -> vector<8x96xf32>
    %16 = vector.extract_strided_slice %14 {offsets = [0, 0], sizes = [8, 32], strides = [1, 1]} : vector<8x96xf32> to vector<8x32xf32>
    %17 = vector.extract_strided_slice %15 {offsets = [0, 0], sizes = [8, 32], strides = [1, 1]} : vector<8x96xf32> to vector<8x32xf32>
    %18 = arith.addf %16, %17 : vector<8x32xf32>
    %19 = arith.negf %18 : vector<8x32xf32>
    %20 = math.exp %19 : vector<8x32xf32>
    %cst_20 = arith.constant 1.000000e+00 : f32
    %21 = vector.broadcast %cst_20 : f32 to vector<8x32xf32>
    %22 = arith.addf %21, %20 : vector<8x32xf32>
    %23 = arith.divf %21, %22 : vector<8x32xf32>
    %24 = vector.extract_strided_slice %14 {offsets = [0, 32], sizes = [8, 32], strides = [1, 1]} : vector<8x96xf32> to vector<8x32xf32>
    %25 = vector.extract_strided_slice %15 {offsets = [0, 32], sizes = [8, 32], strides = [1, 1]} : vector<8x96xf32> to vector<8x32xf32>
    %26 = arith.addf %24, %25 : vector<8x32xf32>
    %27 = arith.negf %26 : vector<8x32xf32>
    %28 = math.exp %27 : vector<8x32xf32>
    %cst_21 = arith.constant 1.000000e+00 : f32
    %29 = vector.broadcast %cst_21 : f32 to vector<8x32xf32>
    %30 = arith.addf %29, %28 : vector<8x32xf32>
    %31 = arith.divf %29, %30 : vector<8x32xf32>
    %32 = vector.extract_strided_slice %14 {offsets = [0, 64], sizes = [8, 32], strides = [1, 1]} : vector<8x96xf32> to vector<8x32xf32>
    %33 = vector.extract_strided_slice %15 {offsets = [0, 64], sizes = [8, 32], strides = [1, 1]} : vector<8x96xf32> to vector<8x32xf32>
    %34 = vector.broadcast %6 : vector<1x32xf32> to vector<8x32xf32>
    %35 = arith.addf %33, %34 : vector<8x32xf32>
    %36 = arith.mulf %23, %35 : vector<8x32xf32>
    %37 = arith.addf %32, %36 : vector<8x32xf32>
    %38 = math.tanh %37 : vector<8x32xf32>
    %cst_22 = arith.constant 1.000000e+00 : f32
    %39 = vector.broadcast %cst_22 : f32 to vector<8x32xf32>
    %40 = arith.subf %39, %31 : vector<8x32xf32>
    %41 = arith.mulf %40, %38 : vector<8x32xf32>
    %42 = arith.mulf %31, %13 : vector<8x32xf32>
    %43 = arith.addf %41, %42 : vector<8x32xf32>
    %44 = vector.extract_strided_slice %12 {offsets = [8, 0], sizes = [8, 96], strides = [1, 1]} : vector<128x96xf32> to vector<8x96xf32>
    %cst_23 = arith.constant dense<0.000000e+00> : vector<8x96xf32>
    %45 = tpu.matmul %43, %3, %cst_23 {dimension_numbers = #tpu.dot_dimension_numbers<[1], [0], [0], [1], [0, 0, 1, 1], [], []>} : vector<8x32xf32>, vector<32x96xf32>, vector<8x96xf32> -> vector<8x96xf32>
    %46 = vector.extract_strided_slice %44 {offsets = [0, 0], sizes = [8, 32], strides = [1, 1]} : vector<8x96xf32> to vector<8x32xf32>
    %47 = vector.extract_strided_slice %45 {offsets = [0, 0], sizes = [8, 32], strides = [1, 1]} : vector<8x96xf32> to vector<8x32xf32>
    %48 = arith.addf %46, %47 : vector<8x32xf32>
    %49 = arith.negf %48 : vector<8x32xf32>
    %50 = math.exp %49 : vector<8x32xf32>
    %cst_24 = arith.constant 1.000000e+00 : f32
    %51 = vector.broadcast %cst_24 : f32 to vector<8x32xf32>
    %52 = arith.addf %51, %50 : vector<8x32xf32>
    %53 = arith.divf %51, %52 : vector<8x32xf32>
    %54 = vector.extract_strided_slice %44 {offsets = [0, 32], sizes = [8, 32], strides = [1, 1]} : vector<8x96xf32> to vector<8x32xf32>
    %55 = vector.extract_strided_slice %45 {offsets = [0, 32], sizes = [8, 32], strides = [1, 1]} : vector<8x96xf32> to vector<8x32xf32>
    %56 = arith.addf %54, %55 : vector<8x32xf32>
    %57 = arith.negf %56 : vector<8x32xf32>
    %58 = math.exp %57 : vector<8x32xf32>
    %cst_25 = arith.constant 1.000000e+00 : f32
    %59 = vector.broadcast %cst_25 : f32 to vector<8x32xf32>
    %60 = arith.addf %59, %58 : vector<8x32xf32>
    %61 = arith.divf %59, %60 : vector<8x32xf32>
    %62 = vector.extract_strided_slice %44 {offsets = [0, 64], sizes = [8, 32], strides = [1, 1]} : vector<8x96xf32> to vector<8x32xf32>
    %63 = vector.extract_strided_slice %45 {offsets = [0, 64], sizes = [8, 32], strides = [1, 1]} : vector<8x96xf32> to vector<8x32xf32>
    %64 = vector.broadcast %6 : vector<1x32xf32> to vector<8x32xf32>
    %65 = arith.addf %63, %64 : vector<8x32xf32>
    %66 = arith.mulf %53, %65 : vector<8x32xf32>
    %67 = arith.addf %62, %66 : vector<8x32xf32>
    %68 = math.tanh %67 : vector<8x32xf32>
    %cst_26 = arith.constant 1.000000e+00 : f32
    %69 = vector.broadcast %cst_26 : f32 to vector<8x32xf32>
    %70 = arith.subf %69, %61 : vector<8x32xf32>
    %71 = arith.mulf %70, %68 : vector<8x32xf32>
    %72 = arith.mulf %61, %43 : vector<8x32xf32>
    %73 = arith.addf %71, %72 : vector<8x32xf32>
    %74 = vector.extract_strided_slice %12 {offsets = [16, 0], sizes = [8, 96], strides = [1, 1]} : vector<128x96xf32> to vector<8x96xf32>
    %cst_27 = arith.constant dense<0.000000e+00> : vector<8x96xf32>
    %75 = tpu.matmul %73, %3, %cst_27 {dimension_numbers = #tpu.dot_dimension_numbers<[1], [0], [0], [1], [0, 0, 1, 1], [], []>} : vector<8x32xf32>, vector<32x96xf32>, vector<8x96xf32> -> vector<8x96xf32>
    %76 = vector.extract_strided_slice %74 {offsets = [0, 0], sizes = [8, 32], strides = [1, 1]} : vector<8x96xf32> to vector<8x32xf32>
    %77 = vector.extract_strided_slice %75 {offsets = [0, 0], sizes = [8, 32], strides = [1, 1]} : vector<8x96xf32> to vector<8x32xf32>
    %78 = arith.addf %76, %77 : vector<8x32xf32>
    %79 = arith.negf %78 : vector<8x32xf32>
    %80 = math.exp %79 : vector<8x32xf32>
    %cst_28 = arith.constant 1.000000e+00 : f32
    %81 = vector.broadcast %cst_28 : f32 to vector<8x32xf32>
    %82 = arith.addf %81, %80 : vector<8x32xf32>
    %83 = arith.divf %81, %82 : vector<8x32xf32>
    %84 = vector.extract_strided_slice %74 {offsets = [0, 32], sizes = [8, 32], strides = [1, 1]} : vector<8x96xf32> to vector<8x32xf32>
    %85 = vector.extract_strided_slice %75 {offsets = [0, 32], sizes = [8, 32], strides = [1, 1]} : vector<8x96xf32> to vector<8x32xf32>
    %86 = arith.addf %84, %85 : vector<8x32xf32>
    %87 = arith.negf %86 : vector<8x32xf32>
    %88 = math.exp %87 : vector<8x32xf32>
    %cst_29 = arith.constant 1.000000e+00 : f32
    %89 = vector.broadcast %cst_29 : f32 to vector<8x32xf32>
    %90 = arith.addf %89, %88 : vector<8x32xf32>
    %91 = arith.divf %89, %90 : vector<8x32xf32>
    %92 = vector.extract_strided_slice %74 {offsets = [0, 64], sizes = [8, 32], strides = [1, 1]} : vector<8x96xf32> to vector<8x32xf32>
    %93 = vector.extract_strided_slice %75 {offsets = [0, 64], sizes = [8, 32], strides = [1, 1]} : vector<8x96xf32> to vector<8x32xf32>
    %94 = vector.broadcast %6 : vector<1x32xf32> to vector<8x32xf32>
    %95 = arith.addf %93, %94 : vector<8x32xf32>
    %96 = arith.mulf %83, %95 : vector<8x32xf32>
    %97 = arith.addf %92, %96 : vector<8x32xf32>
    %98 = math.tanh %97 : vector<8x32xf32>
    %cst_30 = arith.constant 1.000000e+00 : f32
    %99 = vector.broadcast %cst_30 : f32 to vector<8x32xf32>
    %100 = arith.subf %99, %91 : vector<8x32xf32>
    %101 = arith.mulf %100, %98 : vector<8x32xf32>
    %102 = arith.mulf %91, %73 : vector<8x32xf32>
    %103 = arith.addf %101, %102 : vector<8x32xf32>
    %104 = vector.extract_strided_slice %12 {offsets = [24, 0], sizes = [8, 96], strides = [1, 1]} : vector<128x96xf32> to vector<8x96xf32>
    %cst_31 = arith.constant dense<0.000000e+00> : vector<8x96xf32>
    %105 = tpu.matmul %103, %3, %cst_31 {dimension_numbers = #tpu.dot_dimension_numbers<[1], [0], [0], [1], [0, 0, 1, 1], [], []>} : vector<8x32xf32>, vector<32x96xf32>, vector<8x96xf32> -> vector<8x96xf32>
    %106 = vector.extract_strided_slice %104 {offsets = [0, 0], sizes = [8, 32], strides = [1, 1]} : vector<8x96xf32> to vector<8x32xf32>
    %107 = vector.extract_strided_slice %105 {offsets = [0, 0], sizes = [8, 32], strides = [1, 1]} : vector<8x96xf32> to vector<8x32xf32>
    %108 = arith.addf %106, %107 : vector<8x32xf32>
    %109 = arith.negf %108 : vector<8x32xf32>
    %110 = math.exp %109 : vector<8x32xf32>
    %cst_32 = arith.constant 1.000000e+00 : f32
    %111 = vector.broadcast %cst_32 : f32 to vector<8x32xf32>
    %112 = arith.addf %111, %110 : vector<8x32xf32>
    %113 = arith.divf %111, %112 : vector<8x32xf32>
    %114 = vector.extract_strided_slice %104 {offsets = [0, 32], sizes = [8, 32], strides = [1, 1]} : vector<8x96xf32> to vector<8x32xf32>
    %115 = vector.extract_strided_slice %105 {offsets = [0, 32], sizes = [8, 32], strides = [1, 1]} : vector<8x96xf32> to vector<8x32xf32>
    %116 = arith.addf %114, %115 : vector<8x32xf32>
    %117 = arith.negf %116 : vector<8x32xf32>
    %118 = math.exp %117 : vector<8x32xf32>
    %cst_33 = arith.constant 1.000000e+00 : f32
    %119 = vector.broadcast %cst_33 : f32 to vector<8x32xf32>
    %120 = arith.addf %119, %118 : vector<8x32xf32>
    %121 = arith.divf %119, %120 : vector<8x32xf32>
    %122 = vector.extract_strided_slice %104 {offsets = [0, 64], sizes = [8, 32], strides = [1, 1]} : vector<8x96xf32> to vector<8x32xf32>
    %123 = vector.extract_strided_slice %105 {offsets = [0, 64], sizes = [8, 32], strides = [1, 1]} : vector<8x96xf32> to vector<8x32xf32>
    %124 = vector.broadcast %6 : vector<1x32xf32> to vector<8x32xf32>
    %125 = arith.addf %123, %124 : vector<8x32xf32>
    %126 = arith.mulf %113, %125 : vector<8x32xf32>
    %127 = arith.addf %122, %126 : vector<8x32xf32>
    %128 = math.tanh %127 : vector<8x32xf32>
    %cst_34 = arith.constant 1.000000e+00 : f32
    %129 = vector.broadcast %cst_34 : f32 to vector<8x32xf32>
    %130 = arith.subf %129, %121 : vector<8x32xf32>
    %131 = arith.mulf %130, %128 : vector<8x32xf32>
    %132 = arith.mulf %121, %103 : vector<8x32xf32>
    %133 = arith.addf %131, %132 : vector<8x32xf32>
    %134 = vector.extract_strided_slice %12 {offsets = [32, 0], sizes = [8, 96], strides = [1, 1]} : vector<128x96xf32> to vector<8x96xf32>
    %cst_35 = arith.constant dense<0.000000e+00> : vector<8x96xf32>
    %135 = tpu.matmul %133, %3, %cst_35 {dimension_numbers = #tpu.dot_dimension_numbers<[1], [0], [0], [1], [0, 0, 1, 1], [], []>} : vector<8x32xf32>, vector<32x96xf32>, vector<8x96xf32> -> vector<8x96xf32>
    %136 = vector.extract_strided_slice %134 {offsets = [0, 0], sizes = [8, 32], strides = [1, 1]} : vector<8x96xf32> to vector<8x32xf32>
    %137 = vector.extract_strided_slice %135 {offsets = [0, 0], sizes = [8, 32], strides = [1, 1]} : vector<8x96xf32> to vector<8x32xf32>
    %138 = arith.addf %136, %137 : vector<8x32xf32>
    %139 = arith.negf %138 : vector<8x32xf32>
    %140 = math.exp %139 : vector<8x32xf32>
    %cst_36 = arith.constant 1.000000e+00 : f32
    %141 = vector.broadcast %cst_36 : f32 to vector<8x32xf32>
    %142 = arith.addf %141, %140 : vector<8x32xf32>
    %143 = arith.divf %141, %142 : vector<8x32xf32>
    %144 = vector.extract_strided_slice %134 {offsets = [0, 32], sizes = [8, 32], strides = [1, 1]} : vector<8x96xf32> to vector<8x32xf32>
    %145 = vector.extract_strided_slice %135 {offsets = [0, 32], sizes = [8, 32], strides = [1, 1]} : vector<8x96xf32> to vector<8x32xf32>
    %146 = arith.addf %144, %145 : vector<8x32xf32>
    %147 = arith.negf %146 : vector<8x32xf32>
    %148 = math.exp %147 : vector<8x32xf32>
    %cst_37 = arith.constant 1.000000e+00 : f32
    %149 = vector.broadcast %cst_37 : f32 to vector<8x32xf32>
    %150 = arith.addf %149, %148 : vector<8x32xf32>
    %151 = arith.divf %149, %150 : vector<8x32xf32>
    %152 = vector.extract_strided_slice %134 {offsets = [0, 64], sizes = [8, 32], strides = [1, 1]} : vector<8x96xf32> to vector<8x32xf32>
    %153 = vector.extract_strided_slice %135 {offsets = [0, 64], sizes = [8, 32], strides = [1, 1]} : vector<8x96xf32> to vector<8x32xf32>
    %154 = vector.broadcast %6 : vector<1x32xf32> to vector<8x32xf32>
    %155 = arith.addf %153, %154 : vector<8x32xf32>
    %156 = arith.mulf %143, %155 : vector<8x32xf32>
    %157 = arith.addf %152, %156 : vector<8x32xf32>
    %158 = math.tanh %157 : vector<8x32xf32>
    %cst_38 = arith.constant 1.000000e+00 : f32
    %159 = vector.broadcast %cst_38 : f32 to vector<8x32xf32>
    %160 = arith.subf %159, %151 : vector<8x32xf32>
    %161 = arith.mulf %160, %158 : vector<8x32xf32>
    %162 = arith.mulf %151, %133 : vector<8x32xf32>
    %163 = arith.addf %161, %162 : vector<8x32xf32>
    %164 = vector.extract_strided_slice %12 {offsets = [40, 0], sizes = [8, 96], strides = [1, 1]} : vector<128x96xf32> to vector<8x96xf32>
    %cst_39 = arith.constant dense<0.000000e+00> : vector<8x96xf32>
    %165 = tpu.matmul %163, %3, %cst_39 {dimension_numbers = #tpu.dot_dimension_numbers<[1], [0], [0], [1], [0, 0, 1, 1], [], []>} : vector<8x32xf32>, vector<32x96xf32>, vector<8x96xf32> -> vector<8x96xf32>
    %166 = vector.extract_strided_slice %164 {offsets = [0, 0], sizes = [8, 32], strides = [1, 1]} : vector<8x96xf32> to vector<8x32xf32>
    %167 = vector.extract_strided_slice %165 {offsets = [0, 0], sizes = [8, 32], strides = [1, 1]} : vector<8x96xf32> to vector<8x32xf32>
    %168 = arith.addf %166, %167 : vector<8x32xf32>
    %169 = arith.negf %168 : vector<8x32xf32>
    %170 = math.exp %169 : vector<8x32xf32>
    %cst_40 = arith.constant 1.000000e+00 : f32
    %171 = vector.broadcast %cst_40 : f32 to vector<8x32xf32>
    %172 = arith.addf %171, %170 : vector<8x32xf32>
    %173 = arith.divf %171, %172 : vector<8x32xf32>
    %174 = vector.extract_strided_slice %164 {offsets = [0, 32], sizes = [8, 32], strides = [1, 1]} : vector<8x96xf32> to vector<8x32xf32>
    %175 = vector.extract_strided_slice %165 {offsets = [0, 32], sizes = [8, 32], strides = [1, 1]} : vector<8x96xf32> to vector<8x32xf32>
    %176 = arith.addf %174, %175 : vector<8x32xf32>
    %177 = arith.negf %176 : vector<8x32xf32>
    %178 = math.exp %177 : vector<8x32xf32>
    %cst_41 = arith.constant 1.000000e+00 : f32
    %179 = vector.broadcast %cst_41 : f32 to vector<8x32xf32>
    %180 = arith.addf %179, %178 : vector<8x32xf32>
    %181 = arith.divf %179, %180 : vector<8x32xf32>
    %182 = vector.extract_strided_slice %164 {offsets = [0, 64], sizes = [8, 32], strides = [1, 1]} : vector<8x96xf32> to vector<8x32xf32>
    %183 = vector.extract_strided_slice %165 {offsets = [0, 64], sizes = [8, 32], strides = [1, 1]} : vector<8x96xf32> to vector<8x32xf32>
    %184 = vector.broadcast %6 : vector<1x32xf32> to vector<8x32xf32>
    %185 = arith.addf %183, %184 : vector<8x32xf32>
    %186 = arith.mulf %173, %185 : vector<8x32xf32>
    %187 = arith.addf %182, %186 : vector<8x32xf32>
    %188 = math.tanh %187 : vector<8x32xf32>
    %cst_42 = arith.constant 1.000000e+00 : f32
    %189 = vector.broadcast %cst_42 : f32 to vector<8x32xf32>
    %190 = arith.subf %189, %181 : vector<8x32xf32>
    %191 = arith.mulf %190, %188 : vector<8x32xf32>
    %192 = arith.mulf %181, %163 : vector<8x32xf32>
    %193 = arith.addf %191, %192 : vector<8x32xf32>
    %194 = vector.extract_strided_slice %12 {offsets = [48, 0], sizes = [8, 96], strides = [1, 1]} : vector<128x96xf32> to vector<8x96xf32>
    %cst_43 = arith.constant dense<0.000000e+00> : vector<8x96xf32>
    %195 = tpu.matmul %193, %3, %cst_43 {dimension_numbers = #tpu.dot_dimension_numbers<[1], [0], [0], [1], [0, 0, 1, 1], [], []>} : vector<8x32xf32>, vector<32x96xf32>, vector<8x96xf32> -> vector<8x96xf32>
    %196 = vector.extract_strided_slice %194 {offsets = [0, 0], sizes = [8, 32], strides = [1, 1]} : vector<8x96xf32> to vector<8x32xf32>
    %197 = vector.extract_strided_slice %195 {offsets = [0, 0], sizes = [8, 32], strides = [1, 1]} : vector<8x96xf32> to vector<8x32xf32>
    %198 = arith.addf %196, %197 : vector<8x32xf32>
    %199 = arith.negf %198 : vector<8x32xf32>
    %200 = math.exp %199 : vector<8x32xf32>
    %cst_44 = arith.constant 1.000000e+00 : f32
    %201 = vector.broadcast %cst_44 : f32 to vector<8x32xf32>
    %202 = arith.addf %201, %200 : vector<8x32xf32>
    %203 = arith.divf %201, %202 : vector<8x32xf32>
    %204 = vector.extract_strided_slice %194 {offsets = [0, 32], sizes = [8, 32], strides = [1, 1]} : vector<8x96xf32> to vector<8x32xf32>
    %205 = vector.extract_strided_slice %195 {offsets = [0, 32], sizes = [8, 32], strides = [1, 1]} : vector<8x96xf32> to vector<8x32xf32>
    %206 = arith.addf %204, %205 : vector<8x32xf32>
    %207 = arith.negf %206 : vector<8x32xf32>
    %208 = math.exp %207 : vector<8x32xf32>
    %cst_45 = arith.constant 1.000000e+00 : f32
    %209 = vector.broadcast %cst_45 : f32 to vector<8x32xf32>
    %210 = arith.addf %209, %208 : vector<8x32xf32>
    %211 = arith.divf %209, %210 : vector<8x32xf32>
    %212 = vector.extract_strided_slice %194 {offsets = [0, 64], sizes = [8, 32], strides = [1, 1]} : vector<8x96xf32> to vector<8x32xf32>
    %213 = vector.extract_strided_slice %195 {offsets = [0, 64], sizes = [8, 32], strides = [1, 1]} : vector<8x96xf32> to vector<8x32xf32>
    %214 = vector.broadcast %6 : vector<1x32xf32> to vector<8x32xf32>
    %215 = arith.addf %213, %214 : vector<8x32xf32>
    %216 = arith.mulf %203, %215 : vector<8x32xf32>
    %217 = arith.addf %212, %216 : vector<8x32xf32>
    %218 = math.tanh %217 : vector<8x32xf32>
    %cst_46 = arith.constant 1.000000e+00 : f32
    %219 = vector.broadcast %cst_46 : f32 to vector<8x32xf32>
    %220 = arith.subf %219, %211 : vector<8x32xf32>
    %221 = arith.mulf %220, %218 : vector<8x32xf32>
    %222 = arith.mulf %211, %193 : vector<8x32xf32>
    %223 = arith.addf %221, %222 : vector<8x32xf32>
    %224 = vector.extract_strided_slice %12 {offsets = [56, 0], sizes = [8, 96], strides = [1, 1]} : vector<128x96xf32> to vector<8x96xf32>
    %cst_47 = arith.constant dense<0.000000e+00> : vector<8x96xf32>
    %225 = tpu.matmul %223, %3, %cst_47 {dimension_numbers = #tpu.dot_dimension_numbers<[1], [0], [0], [1], [0, 0, 1, 1], [], []>} : vector<8x32xf32>, vector<32x96xf32>, vector<8x96xf32> -> vector<8x96xf32>
    %226 = vector.extract_strided_slice %224 {offsets = [0, 0], sizes = [8, 32], strides = [1, 1]} : vector<8x96xf32> to vector<8x32xf32>
    %227 = vector.extract_strided_slice %225 {offsets = [0, 0], sizes = [8, 32], strides = [1, 1]} : vector<8x96xf32> to vector<8x32xf32>
    %228 = arith.addf %226, %227 : vector<8x32xf32>
    %229 = arith.negf %228 : vector<8x32xf32>
    %230 = math.exp %229 : vector<8x32xf32>
    %cst_48 = arith.constant 1.000000e+00 : f32
    %231 = vector.broadcast %cst_48 : f32 to vector<8x32xf32>
    %232 = arith.addf %231, %230 : vector<8x32xf32>
    %233 = arith.divf %231, %232 : vector<8x32xf32>
    %234 = vector.extract_strided_slice %224 {offsets = [0, 32], sizes = [8, 32], strides = [1, 1]} : vector<8x96xf32> to vector<8x32xf32>
    %235 = vector.extract_strided_slice %225 {offsets = [0, 32], sizes = [8, 32], strides = [1, 1]} : vector<8x96xf32> to vector<8x32xf32>
    %236 = arith.addf %234, %235 : vector<8x32xf32>
    %237 = arith.negf %236 : vector<8x32xf32>
    %238 = math.exp %237 : vector<8x32xf32>
    %cst_49 = arith.constant 1.000000e+00 : f32
    %239 = vector.broadcast %cst_49 : f32 to vector<8x32xf32>
    %240 = arith.addf %239, %238 : vector<8x32xf32>
    %241 = arith.divf %239, %240 : vector<8x32xf32>
    %242 = vector.extract_strided_slice %224 {offsets = [0, 64], sizes = [8, 32], strides = [1, 1]} : vector<8x96xf32> to vector<8x32xf32>
    %243 = vector.extract_strided_slice %225 {offsets = [0, 64], sizes = [8, 32], strides = [1, 1]} : vector<8x96xf32> to vector<8x32xf32>
    %244 = vector.broadcast %6 : vector<1x32xf32> to vector<8x32xf32>
    %245 = arith.addf %243, %244 : vector<8x32xf32>
    %246 = arith.mulf %233, %245 : vector<8x32xf32>
    %247 = arith.addf %242, %246 : vector<8x32xf32>
    %248 = math.tanh %247 : vector<8x32xf32>
    %cst_50 = arith.constant 1.000000e+00 : f32
    %249 = vector.broadcast %cst_50 : f32 to vector<8x32xf32>
    %250 = arith.subf %249, %241 : vector<8x32xf32>
    %251 = arith.mulf %250, %248 : vector<8x32xf32>
    %252 = arith.mulf %241, %223 : vector<8x32xf32>
    %253 = arith.addf %251, %252 : vector<8x32xf32>
    %254 = vector.extract_strided_slice %12 {offsets = [64, 0], sizes = [8, 96], strides = [1, 1]} : vector<128x96xf32> to vector<8x96xf32>
    %cst_51 = arith.constant dense<0.000000e+00> : vector<8x96xf32>
    %255 = tpu.matmul %253, %3, %cst_51 {dimension_numbers = #tpu.dot_dimension_numbers<[1], [0], [0], [1], [0, 0, 1, 1], [], []>} : vector<8x32xf32>, vector<32x96xf32>, vector<8x96xf32> -> vector<8x96xf32>
    %256 = vector.extract_strided_slice %254 {offsets = [0, 0], sizes = [8, 32], strides = [1, 1]} : vector<8x96xf32> to vector<8x32xf32>
    %257 = vector.extract_strided_slice %255 {offsets = [0, 0], sizes = [8, 32], strides = [1, 1]} : vector<8x96xf32> to vector<8x32xf32>
    %258 = arith.addf %256, %257 : vector<8x32xf32>
    %259 = arith.negf %258 : vector<8x32xf32>
    %260 = math.exp %259 : vector<8x32xf32>
    %cst_52 = arith.constant 1.000000e+00 : f32
    %261 = vector.broadcast %cst_52 : f32 to vector<8x32xf32>
    %262 = arith.addf %261, %260 : vector<8x32xf32>
    %263 = arith.divf %261, %262 : vector<8x32xf32>
    %264 = vector.extract_strided_slice %254 {offsets = [0, 32], sizes = [8, 32], strides = [1, 1]} : vector<8x96xf32> to vector<8x32xf32>
    %265 = vector.extract_strided_slice %255 {offsets = [0, 32], sizes = [8, 32], strides = [1, 1]} : vector<8x96xf32> to vector<8x32xf32>
    %266 = arith.addf %264, %265 : vector<8x32xf32>
    %267 = arith.negf %266 : vector<8x32xf32>
    %268 = math.exp %267 : vector<8x32xf32>
    %cst_53 = arith.constant 1.000000e+00 : f32
    %269 = vector.broadcast %cst_53 : f32 to vector<8x32xf32>
    %270 = arith.addf %269, %268 : vector<8x32xf32>
    %271 = arith.divf %269, %270 : vector<8x32xf32>
    %272 = vector.extract_strided_slice %254 {offsets = [0, 64], sizes = [8, 32], strides = [1, 1]} : vector<8x96xf32> to vector<8x32xf32>
    %273 = vector.extract_strided_slice %255 {offsets = [0, 64], sizes = [8, 32], strides = [1, 1]} : vector<8x96xf32> to vector<8x32xf32>
    %274 = vector.broadcast %6 : vector<1x32xf32> to vector<8x32xf32>
    %275 = arith.addf %273, %274 : vector<8x32xf32>
    %276 = arith.mulf %263, %275 : vector<8x32xf32>
    %277 = arith.addf %272, %276 : vector<8x32xf32>
    %278 = math.tanh %277 : vector<8x32xf32>
    %cst_54 = arith.constant 1.000000e+00 : f32
    %279 = vector.broadcast %cst_54 : f32 to vector<8x32xf32>
    %280 = arith.subf %279, %271 : vector<8x32xf32>
    %281 = arith.mulf %280, %278 : vector<8x32xf32>
    %282 = arith.mulf %271, %253 : vector<8x32xf32>
    %283 = arith.addf %281, %282 : vector<8x32xf32>
    %284 = vector.extract_strided_slice %12 {offsets = [72, 0], sizes = [8, 96], strides = [1, 1]} : vector<128x96xf32> to vector<8x96xf32>
    %cst_55 = arith.constant dense<0.000000e+00> : vector<8x96xf32>
    %285 = tpu.matmul %283, %3, %cst_55 {dimension_numbers = #tpu.dot_dimension_numbers<[1], [0], [0], [1], [0, 0, 1, 1], [], []>} : vector<8x32xf32>, vector<32x96xf32>, vector<8x96xf32> -> vector<8x96xf32>
    %286 = vector.extract_strided_slice %284 {offsets = [0, 0], sizes = [8, 32], strides = [1, 1]} : vector<8x96xf32> to vector<8x32xf32>
    %287 = vector.extract_strided_slice %285 {offsets = [0, 0], sizes = [8, 32], strides = [1, 1]} : vector<8x96xf32> to vector<8x32xf32>
    %288 = arith.addf %286, %287 : vector<8x32xf32>
    %289 = arith.negf %288 : vector<8x32xf32>
    %290 = math.exp %289 : vector<8x32xf32>
    %cst_56 = arith.constant 1.000000e+00 : f32
    %291 = vector.broadcast %cst_56 : f32 to vector<8x32xf32>
    %292 = arith.addf %291, %290 : vector<8x32xf32>
    %293 = arith.divf %291, %292 : vector<8x32xf32>
    %294 = vector.extract_strided_slice %284 {offsets = [0, 32], sizes = [8, 32], strides = [1, 1]} : vector<8x96xf32> to vector<8x32xf32>
    %295 = vector.extract_strided_slice %285 {offsets = [0, 32], sizes = [8, 32], strides = [1, 1]} : vector<8x96xf32> to vector<8x32xf32>
    %296 = arith.addf %294, %295 : vector<8x32xf32>
    %297 = arith.negf %296 : vector<8x32xf32>
    %298 = math.exp %297 : vector<8x32xf32>
    %cst_57 = arith.constant 1.000000e+00 : f32
    %299 = vector.broadcast %cst_57 : f32 to vector<8x32xf32>
    %300 = arith.addf %299, %298 : vector<8x32xf32>
    %301 = arith.divf %299, %300 : vector<8x32xf32>
    %302 = vector.extract_strided_slice %284 {offsets = [0, 64], sizes = [8, 32], strides = [1, 1]} : vector<8x96xf32> to vector<8x32xf32>
    %303 = vector.extract_strided_slice %285 {offsets = [0, 64], sizes = [8, 32], strides = [1, 1]} : vector<8x96xf32> to vector<8x32xf32>
    %304 = vector.broadcast %6 : vector<1x32xf32> to vector<8x32xf32>
    %305 = arith.addf %303, %304 : vector<8x32xf32>
    %306 = arith.mulf %293, %305 : vector<8x32xf32>
    %307 = arith.addf %302, %306 : vector<8x32xf32>
    %308 = math.tanh %307 : vector<8x32xf32>
    %cst_58 = arith.constant 1.000000e+00 : f32
    %309 = vector.broadcast %cst_58 : f32 to vector<8x32xf32>
    %310 = arith.subf %309, %301 : vector<8x32xf32>
    %311 = arith.mulf %310, %308 : vector<8x32xf32>
    %312 = arith.mulf %301, %283 : vector<8x32xf32>
    %313 = arith.addf %311, %312 : vector<8x32xf32>
    %314 = vector.extract_strided_slice %12 {offsets = [80, 0], sizes = [8, 96], strides = [1, 1]} : vector<128x96xf32> to vector<8x96xf32>
    %cst_59 = arith.constant dense<0.000000e+00> : vector<8x96xf32>
    %315 = tpu.matmul %313, %3, %cst_59 {dimension_numbers = #tpu.dot_dimension_numbers<[1], [0], [0], [1], [0, 0, 1, 1], [], []>} : vector<8x32xf32>, vector<32x96xf32>, vector<8x96xf32> -> vector<8x96xf32>
    %316 = vector.extract_strided_slice %314 {offsets = [0, 0], sizes = [8, 32], strides = [1, 1]} : vector<8x96xf32> to vector<8x32xf32>
    %317 = vector.extract_strided_slice %315 {offsets = [0, 0], sizes = [8, 32], strides = [1, 1]} : vector<8x96xf32> to vector<8x32xf32>
    %318 = arith.addf %316, %317 : vector<8x32xf32>
    %319 = arith.negf %318 : vector<8x32xf32>
    %320 = math.exp %319 : vector<8x32xf32>
    %cst_60 = arith.constant 1.000000e+00 : f32
    %321 = vector.broadcast %cst_60 : f32 to vector<8x32xf32>
    %322 = arith.addf %321, %320 : vector<8x32xf32>
    %323 = arith.divf %321, %322 : vector<8x32xf32>
    %324 = vector.extract_strided_slice %314 {offsets = [0, 32], sizes = [8, 32], strides = [1, 1]} : vector<8x96xf32> to vector<8x32xf32>
    %325 = vector.extract_strided_slice %315 {offsets = [0, 32], sizes = [8, 32], strides = [1, 1]} : vector<8x96xf32> to vector<8x32xf32>
    %326 = arith.addf %324, %325 : vector<8x32xf32>
    %327 = arith.negf %326 : vector<8x32xf32>
    %328 = math.exp %327 : vector<8x32xf32>
    %cst_61 = arith.constant 1.000000e+00 : f32
    %329 = vector.broadcast %cst_61 : f32 to vector<8x32xf32>
    %330 = arith.addf %329, %328 : vector<8x32xf32>
    %331 = arith.divf %329, %330 : vector<8x32xf32>
    %332 = vector.extract_strided_slice %314 {offsets = [0, 64], sizes = [8, 32], strides = [1, 1]} : vector<8x96xf32> to vector<8x32xf32>
    %333 = vector.extract_strided_slice %315 {offsets = [0, 64], sizes = [8, 32], strides = [1, 1]} : vector<8x96xf32> to vector<8x32xf32>
    %334 = vector.broadcast %6 : vector<1x32xf32> to vector<8x32xf32>
    %335 = arith.addf %333, %334 : vector<8x32xf32>
    %336 = arith.mulf %323, %335 : vector<8x32xf32>
    %337 = arith.addf %332, %336 : vector<8x32xf32>
    %338 = math.tanh %337 : vector<8x32xf32>
    %cst_62 = arith.constant 1.000000e+00 : f32
    %339 = vector.broadcast %cst_62 : f32 to vector<8x32xf32>
    %340 = arith.subf %339, %331 : vector<8x32xf32>
    %341 = arith.mulf %340, %338 : vector<8x32xf32>
    %342 = arith.mulf %331, %313 : vector<8x32xf32>
    %343 = arith.addf %341, %342 : vector<8x32xf32>
    %344 = vector.extract_strided_slice %12 {offsets = [88, 0], sizes = [8, 96], strides = [1, 1]} : vector<128x96xf32> to vector<8x96xf32>
    %cst_63 = arith.constant dense<0.000000e+00> : vector<8x96xf32>
    %345 = tpu.matmul %343, %3, %cst_63 {dimension_numbers = #tpu.dot_dimension_numbers<[1], [0], [0], [1], [0, 0, 1, 1], [], []>} : vector<8x32xf32>, vector<32x96xf32>, vector<8x96xf32> -> vector<8x96xf32>
    %346 = vector.extract_strided_slice %344 {offsets = [0, 0], sizes = [8, 32], strides = [1, 1]} : vector<8x96xf32> to vector<8x32xf32>
    %347 = vector.extract_strided_slice %345 {offsets = [0, 0], sizes = [8, 32], strides = [1, 1]} : vector<8x96xf32> to vector<8x32xf32>
    %348 = arith.addf %346, %347 : vector<8x32xf32>
    %349 = arith.negf %348 : vector<8x32xf32>
    %350 = math.exp %349 : vector<8x32xf32>
    %cst_64 = arith.constant 1.000000e+00 : f32
    %351 = vector.broadcast %cst_64 : f32 to vector<8x32xf32>
    %352 = arith.addf %351, %350 : vector<8x32xf32>
    %353 = arith.divf %351, %352 : vector<8x32xf32>
    %354 = vector.extract_strided_slice %344 {offsets = [0, 32], sizes = [8, 32], strides = [1, 1]} : vector<8x96xf32> to vector<8x32xf32>
    %355 = vector.extract_strided_slice %345 {offsets = [0, 32], sizes = [8, 32], strides = [1, 1]} : vector<8x96xf32> to vector<8x32xf32>
    %356 = arith.addf %354, %355 : vector<8x32xf32>
    %357 = arith.negf %356 : vector<8x32xf32>
    %358 = math.exp %357 : vector<8x32xf32>
    %cst_65 = arith.constant 1.000000e+00 : f32
    %359 = vector.broadcast %cst_65 : f32 to vector<8x32xf32>
    %360 = arith.addf %359, %358 : vector<8x32xf32>
    %361 = arith.divf %359, %360 : vector<8x32xf32>
    %362 = vector.extract_strided_slice %344 {offsets = [0, 64], sizes = [8, 32], strides = [1, 1]} : vector<8x96xf32> to vector<8x32xf32>
    %363 = vector.extract_strided_slice %345 {offsets = [0, 64], sizes = [8, 32], strides = [1, 1]} : vector<8x96xf32> to vector<8x32xf32>
    %364 = vector.broadcast %6 : vector<1x32xf32> to vector<8x32xf32>
    %365 = arith.addf %363, %364 : vector<8x32xf32>
    %366 = arith.mulf %353, %365 : vector<8x32xf32>
    %367 = arith.addf %362, %366 : vector<8x32xf32>
    %368 = math.tanh %367 : vector<8x32xf32>
    %cst_66 = arith.constant 1.000000e+00 : f32
    %369 = vector.broadcast %cst_66 : f32 to vector<8x32xf32>
    %370 = arith.subf %369, %361 : vector<8x32xf32>
    %371 = arith.mulf %370, %368 : vector<8x32xf32>
    %372 = arith.mulf %361, %343 : vector<8x32xf32>
    %373 = arith.addf %371, %372 : vector<8x32xf32>
    %374 = vector.extract_strided_slice %12 {offsets = [96, 0], sizes = [8, 96], strides = [1, 1]} : vector<128x96xf32> to vector<8x96xf32>
    %cst_67 = arith.constant dense<0.000000e+00> : vector<8x96xf32>
    %375 = tpu.matmul %373, %3, %cst_67 {dimension_numbers = #tpu.dot_dimension_numbers<[1], [0], [0], [1], [0, 0, 1, 1], [], []>} : vector<8x32xf32>, vector<32x96xf32>, vector<8x96xf32> -> vector<8x96xf32>
    %376 = vector.extract_strided_slice %374 {offsets = [0, 0], sizes = [8, 32], strides = [1, 1]} : vector<8x96xf32> to vector<8x32xf32>
    %377 = vector.extract_strided_slice %375 {offsets = [0, 0], sizes = [8, 32], strides = [1, 1]} : vector<8x96xf32> to vector<8x32xf32>
    %378 = arith.addf %376, %377 : vector<8x32xf32>
    %379 = arith.negf %378 : vector<8x32xf32>
    %380 = math.exp %379 : vector<8x32xf32>
    %cst_68 = arith.constant 1.000000e+00 : f32
    %381 = vector.broadcast %cst_68 : f32 to vector<8x32xf32>
    %382 = arith.addf %381, %380 : vector<8x32xf32>
    %383 = arith.divf %381, %382 : vector<8x32xf32>
    %384 = vector.extract_strided_slice %374 {offsets = [0, 32], sizes = [8, 32], strides = [1, 1]} : vector<8x96xf32> to vector<8x32xf32>
    %385 = vector.extract_strided_slice %375 {offsets = [0, 32], sizes = [8, 32], strides = [1, 1]} : vector<8x96xf32> to vector<8x32xf32>
    %386 = arith.addf %384, %385 : vector<8x32xf32>
    %387 = arith.negf %386 : vector<8x32xf32>
    %388 = math.exp %387 : vector<8x32xf32>
    %cst_69 = arith.constant 1.000000e+00 : f32
    %389 = vector.broadcast %cst_69 : f32 to vector<8x32xf32>
    %390 = arith.addf %389, %388 : vector<8x32xf32>
    %391 = arith.divf %389, %390 : vector<8x32xf32>
    %392 = vector.extract_strided_slice %374 {offsets = [0, 64], sizes = [8, 32], strides = [1, 1]} : vector<8x96xf32> to vector<8x32xf32>
    %393 = vector.extract_strided_slice %375 {offsets = [0, 64], sizes = [8, 32], strides = [1, 1]} : vector<8x96xf32> to vector<8x32xf32>
    %394 = vector.broadcast %6 : vector<1x32xf32> to vector<8x32xf32>
    %395 = arith.addf %393, %394 : vector<8x32xf32>
    %396 = arith.mulf %383, %395 : vector<8x32xf32>
    %397 = arith.addf %392, %396 : vector<8x32xf32>
    %398 = math.tanh %397 : vector<8x32xf32>
    %cst_70 = arith.constant 1.000000e+00 : f32
    %399 = vector.broadcast %cst_70 : f32 to vector<8x32xf32>
    %400 = arith.subf %399, %391 : vector<8x32xf32>
    %401 = arith.mulf %400, %398 : vector<8x32xf32>
    %402 = arith.mulf %391, %373 : vector<8x32xf32>
    %403 = arith.addf %401, %402 : vector<8x32xf32>
    %404 = vector.extract_strided_slice %12 {offsets = [104, 0], sizes = [8, 96], strides = [1, 1]} : vector<128x96xf32> to vector<8x96xf32>
    %cst_71 = arith.constant dense<0.000000e+00> : vector<8x96xf32>
    %405 = tpu.matmul %403, %3, %cst_71 {dimension_numbers = #tpu.dot_dimension_numbers<[1], [0], [0], [1], [0, 0, 1, 1], [], []>} : vector<8x32xf32>, vector<32x96xf32>, vector<8x96xf32> -> vector<8x96xf32>
    %406 = vector.extract_strided_slice %404 {offsets = [0, 0], sizes = [8, 32], strides = [1, 1]} : vector<8x96xf32> to vector<8x32xf32>
    %407 = vector.extract_strided_slice %405 {offsets = [0, 0], sizes = [8, 32], strides = [1, 1]} : vector<8x96xf32> to vector<8x32xf32>
    %408 = arith.addf %406, %407 : vector<8x32xf32>
    %409 = arith.negf %408 : vector<8x32xf32>
    %410 = math.exp %409 : vector<8x32xf32>
    %cst_72 = arith.constant 1.000000e+00 : f32
    %411 = vector.broadcast %cst_72 : f32 to vector<8x32xf32>
    %412 = arith.addf %411, %410 : vector<8x32xf32>
    %413 = arith.divf %411, %412 : vector<8x32xf32>
    %414 = vector.extract_strided_slice %404 {offsets = [0, 32], sizes = [8, 32], strides = [1, 1]} : vector<8x96xf32> to vector<8x32xf32>
    %415 = vector.extract_strided_slice %405 {offsets = [0, 32], sizes = [8, 32], strides = [1, 1]} : vector<8x96xf32> to vector<8x32xf32>
    %416 = arith.addf %414, %415 : vector<8x32xf32>
    %417 = arith.negf %416 : vector<8x32xf32>
    %418 = math.exp %417 : vector<8x32xf32>
    %cst_73 = arith.constant 1.000000e+00 : f32
    %419 = vector.broadcast %cst_73 : f32 to vector<8x32xf32>
    %420 = arith.addf %419, %418 : vector<8x32xf32>
    %421 = arith.divf %419, %420 : vector<8x32xf32>
    %422 = vector.extract_strided_slice %404 {offsets = [0, 64], sizes = [8, 32], strides = [1, 1]} : vector<8x96xf32> to vector<8x32xf32>
    %423 = vector.extract_strided_slice %405 {offsets = [0, 64], sizes = [8, 32], strides = [1, 1]} : vector<8x96xf32> to vector<8x32xf32>
    %424 = vector.broadcast %6 : vector<1x32xf32> to vector<8x32xf32>
    %425 = arith.addf %423, %424 : vector<8x32xf32>
    %426 = arith.mulf %413, %425 : vector<8x32xf32>
    %427 = arith.addf %422, %426 : vector<8x32xf32>
    %428 = math.tanh %427 : vector<8x32xf32>
    %cst_74 = arith.constant 1.000000e+00 : f32
    %429 = vector.broadcast %cst_74 : f32 to vector<8x32xf32>
    %430 = arith.subf %429, %421 : vector<8x32xf32>
    %431 = arith.mulf %430, %428 : vector<8x32xf32>
    %432 = arith.mulf %421, %403 : vector<8x32xf32>
    %433 = arith.addf %431, %432 : vector<8x32xf32>
    %434 = vector.extract_strided_slice %12 {offsets = [112, 0], sizes = [8, 96], strides = [1, 1]} : vector<128x96xf32> to vector<8x96xf32>
    %cst_75 = arith.constant dense<0.000000e+00> : vector<8x96xf32>
    %435 = tpu.matmul %433, %3, %cst_75 {dimension_numbers = #tpu.dot_dimension_numbers<[1], [0], [0], [1], [0, 0, 1, 1], [], []>} : vector<8x32xf32>, vector<32x96xf32>, vector<8x96xf32> -> vector<8x96xf32>
    %436 = vector.extract_strided_slice %434 {offsets = [0, 0], sizes = [8, 32], strides = [1, 1]} : vector<8x96xf32> to vector<8x32xf32>
    %437 = vector.extract_strided_slice %435 {offsets = [0, 0], sizes = [8, 32], strides = [1, 1]} : vector<8x96xf32> to vector<8x32xf32>
    %438 = arith.addf %436, %437 : vector<8x32xf32>
    %439 = arith.negf %438 : vector<8x32xf32>
    %440 = math.exp %439 : vector<8x32xf32>
    %cst_76 = arith.constant 1.000000e+00 : f32
    %441 = vector.broadcast %cst_76 : f32 to vector<8x32xf32>
    %442 = arith.addf %441, %440 : vector<8x32xf32>
    %443 = arith.divf %441, %442 : vector<8x32xf32>
    %444 = vector.extract_strided_slice %434 {offsets = [0, 32], sizes = [8, 32], strides = [1, 1]} : vector<8x96xf32> to vector<8x32xf32>
    %445 = vector.extract_strided_slice %435 {offsets = [0, 32], sizes = [8, 32], strides = [1, 1]} : vector<8x96xf32> to vector<8x32xf32>
    %446 = arith.addf %444, %445 : vector<8x32xf32>
    %447 = arith.negf %446 : vector<8x32xf32>
    %448 = math.exp %447 : vector<8x32xf32>
    %cst_77 = arith.constant 1.000000e+00 : f32
    %449 = vector.broadcast %cst_77 : f32 to vector<8x32xf32>
    %450 = arith.addf %449, %448 : vector<8x32xf32>
    %451 = arith.divf %449, %450 : vector<8x32xf32>
    %452 = vector.extract_strided_slice %434 {offsets = [0, 64], sizes = [8, 32], strides = [1, 1]} : vector<8x96xf32> to vector<8x32xf32>
    %453 = vector.extract_strided_slice %435 {offsets = [0, 64], sizes = [8, 32], strides = [1, 1]} : vector<8x96xf32> to vector<8x32xf32>
    %454 = vector.broadcast %6 : vector<1x32xf32> to vector<8x32xf32>
    %455 = arith.addf %453, %454 : vector<8x32xf32>
    %456 = arith.mulf %443, %455 : vector<8x32xf32>
    %457 = arith.addf %452, %456 : vector<8x32xf32>
    %458 = math.tanh %457 : vector<8x32xf32>
    %cst_78 = arith.constant 1.000000e+00 : f32
    %459 = vector.broadcast %cst_78 : f32 to vector<8x32xf32>
    %460 = arith.subf %459, %451 : vector<8x32xf32>
    %461 = arith.mulf %460, %458 : vector<8x32xf32>
    %462 = arith.mulf %451, %433 : vector<8x32xf32>
    %463 = arith.addf %461, %462 : vector<8x32xf32>
    %464 = vector.extract_strided_slice %12 {offsets = [120, 0], sizes = [8, 96], strides = [1, 1]} : vector<128x96xf32> to vector<8x96xf32>
    %cst_79 = arith.constant dense<0.000000e+00> : vector<8x96xf32>
    %465 = tpu.matmul %463, %3, %cst_79 {dimension_numbers = #tpu.dot_dimension_numbers<[1], [0], [0], [1], [0, 0, 1, 1], [], []>} : vector<8x32xf32>, vector<32x96xf32>, vector<8x96xf32> -> vector<8x96xf32>
    %466 = vector.extract_strided_slice %464 {offsets = [0, 0], sizes = [8, 32], strides = [1, 1]} : vector<8x96xf32> to vector<8x32xf32>
    %467 = vector.extract_strided_slice %465 {offsets = [0, 0], sizes = [8, 32], strides = [1, 1]} : vector<8x96xf32> to vector<8x32xf32>
    %468 = arith.addf %466, %467 : vector<8x32xf32>
    %469 = arith.negf %468 : vector<8x32xf32>
    %470 = math.exp %469 : vector<8x32xf32>
    %cst_80 = arith.constant 1.000000e+00 : f32
    %471 = vector.broadcast %cst_80 : f32 to vector<8x32xf32>
    %472 = arith.addf %471, %470 : vector<8x32xf32>
    %473 = arith.divf %471, %472 : vector<8x32xf32>
    %474 = vector.extract_strided_slice %464 {offsets = [0, 32], sizes = [8, 32], strides = [1, 1]} : vector<8x96xf32> to vector<8x32xf32>
    %475 = vector.extract_strided_slice %465 {offsets = [0, 32], sizes = [8, 32], strides = [1, 1]} : vector<8x96xf32> to vector<8x32xf32>
    %476 = arith.addf %474, %475 : vector<8x32xf32>
    %477 = arith.negf %476 : vector<8x32xf32>
    %478 = math.exp %477 : vector<8x32xf32>
    %cst_81 = arith.constant 1.000000e+00 : f32
    %479 = vector.broadcast %cst_81 : f32 to vector<8x32xf32>
    %480 = arith.addf %479, %478 : vector<8x32xf32>
    %481 = arith.divf %479, %480 : vector<8x32xf32>
    %482 = vector.extract_strided_slice %464 {offsets = [0, 64], sizes = [8, 32], strides = [1, 1]} : vector<8x96xf32> to vector<8x32xf32>
    %483 = vector.extract_strided_slice %465 {offsets = [0, 64], sizes = [8, 32], strides = [1, 1]} : vector<8x96xf32> to vector<8x32xf32>
    %484 = vector.broadcast %6 : vector<1x32xf32> to vector<8x32xf32>
    %485 = arith.addf %483, %484 : vector<8x32xf32>
    %486 = arith.mulf %473, %485 : vector<8x32xf32>
    %487 = arith.addf %482, %486 : vector<8x32xf32>
    %488 = math.tanh %487 : vector<8x32xf32>
    %cst_82 = arith.constant 1.000000e+00 : f32
    %489 = vector.broadcast %cst_82 : f32 to vector<8x32xf32>
    %490 = arith.subf %489, %481 : vector<8x32xf32>
    %491 = arith.mulf %490, %488 : vector<8x32xf32>
    %492 = arith.mulf %481, %463 : vector<8x32xf32>
    %493 = arith.addf %491, %492 : vector<8x32xf32>
    %494 = tpu.concatenate %403, %433, %463, %493 in 0 : vector<8x32xf32>, vector<8x32xf32>, vector<8x32xf32>, vector<8x32xf32> -> vector<32x32xf32>
    %cst_83 = arith.constant dense<0.000000e+00> : vector<32x192xf32>
    %495 = tpu.matmul %494, %4, %cst_83 {dimension_numbers = #tpu.dot_dimension_numbers<[1], [0], [0], [1], [0, 0, 1, 1], [], []>} : vector<32x32xf32>, vector<32x192xf32>, vector<32x192xf32> -> vector<32x192xf32>
    %496 = vector.broadcast %7 : vector<1x192xf32> to vector<32x192xf32>
    %497 = arith.addf %495, %496 : vector<32x192xf32>
    %498 = vector.extract_strided_slice %497 {offsets = [0, 0], sizes = [32, 96], strides = [1, 1]} : vector<32x192xf32> to vector<32x96xf32>
    %499 = vector.extract_strided_slice %497 {offsets = [0, 96], sizes = [32, 96], strides = [1, 1]} : vector<32x192xf32> to vector<32x96xf32>
    %500 = vector.extract_strided_slice %499 {offsets = [0, 0], sizes = [32, 32], strides = [1, 1]} : vector<32x96xf32> to vector<32x32xf32>
    %501 = vector.extract_strided_slice %498 {offsets = [0, 0], sizes = [32, 32], strides = [1, 1]} : vector<32x96xf32> to vector<32x32xf32>
    %502 = arith.addf %500, %501 : vector<32x32xf32>
    %503 = arith.negf %502 : vector<32x32xf32>
    %504 = math.exp %503 : vector<32x32xf32>
    %cst_84 = arith.constant 1.000000e+00 : f32
    %505 = vector.broadcast %cst_84 : f32 to vector<32x32xf32>
    %506 = arith.addf %505, %504 : vector<32x32xf32>
    %507 = arith.divf %505, %506 : vector<32x32xf32>
    %508 = vector.extract_strided_slice %499 {offsets = [0, 32], sizes = [32, 32], strides = [1, 1]} : vector<32x96xf32> to vector<32x32xf32>
    %509 = vector.extract_strided_slice %498 {offsets = [0, 32], sizes = [32, 32], strides = [1, 1]} : vector<32x96xf32> to vector<32x32xf32>
    %510 = arith.addf %508, %509 : vector<32x32xf32>
    %511 = arith.negf %510 : vector<32x32xf32>
    %512 = math.exp %511 : vector<32x32xf32>
    %cst_85 = arith.constant 1.000000e+00 : f32
    %513 = vector.broadcast %cst_85 : f32 to vector<32x32xf32>
    %514 = arith.addf %513, %512 : vector<32x32xf32>
    %515 = arith.divf %513, %514 : vector<32x32xf32>
    %516 = vector.extract_strided_slice %499 {offsets = [0, 64], sizes = [32, 32], strides = [1, 1]} : vector<32x96xf32> to vector<32x32xf32>
    %517 = vector.extract_strided_slice %498 {offsets = [0, 64], sizes = [32, 32], strides = [1, 1]} : vector<32x96xf32> to vector<32x32xf32>
    %518 = arith.mulf %507, %517 : vector<32x32xf32>
    %519 = arith.addf %516, %518 : vector<32x32xf32>
    %520 = math.tanh %519 : vector<32x32xf32>
    %cst_86 = arith.constant 1.000000e+00 : f32
    %521 = vector.broadcast %cst_86 : f32 to vector<32x32xf32>
    %522 = arith.subf %521, %515 : vector<32x32xf32>
    %523 = arith.mulf %522, %520 : vector<32x32xf32>
    %524 = arith.mulf %515, %494 : vector<32x32xf32>
    %525 = arith.addf %523, %524 : vector<32x32xf32>
    %cst_87 = arith.constant dense<0.000000e+00> : vector<32x4xf32>
    %526 = tpu.matmul %525, %5, %cst_87 {dimension_numbers = #tpu.dot_dimension_numbers<[1], [0], [0], [1], [0, 0, 1, 1], [], []>} : vector<32x32xf32>, vector<32x4xf32>, vector<32x4xf32> -> vector<32x4xf32>
    %527 = vector.broadcast %8 : vector<1x4xf32> to vector<32x4xf32>
    %528 = arith.addf %526, %527 : vector<32x4xf32>
    %c0_88 = arith.constant 0 : index
    %c0_89 = arith.constant 0 : index
    %529 = vector.load %arg6[%c0_88, %c0_89] : memref<32x4xf32, #tpu.memory_space<vmem>>, vector<32x4xf32>
    tpu.vector_store %arg6[%c0_88, %c0_89], %528 {strides = array<i32>} : memref<32x4xf32, #tpu.memory_space<vmem>>, vector<32x4xf32>,
    return
  }
}

</mosaic_0001>

<llo_original>
// kernel: tpu_custom_call.1
$region0: #{tpu_custom_call.1}
  #allocation0 [shape = 'u32[]', space=smem, size = 0x4, offset = 0x4, fixed_abs, tag = 'smem constant byte address 0x4 - core index']
  #allocation1 [shape = 'u32[72,128]{1,0:T(1,128)}', space=vmem, size = 0x9000, scoped, tag = 'internal scratch']
  %s0 = inlined_call_operand.vmem [shape: f32[64,4], index: 0, kind: input, shape index: {}]
  %s1 = inlined_call_operand.vmem [shape: f32[4,96], index: 1, kind: input, shape index: {}]
  %s2 = inlined_call_operand.vmem [shape: f32[128,64], index: 2, kind: input, shape index: {}]
  %s3 = inlined_call_operand.vmem [shape: f32[128,96], index: 3, kind: input, shape index: {}]
  %s4 = inlined_call_operand.vmem [shape: f32[32,196], index: 4, kind: input, shape index: {}]
  %s5 = inlined_call_operand.vmem [shape: f32[1,196], index: 5, kind: input, shape index: {}]
  %s6 = inlined_call_operand.vmem [shape: f32[32,4], index: 6, kind: output, shape index: {}]
  %s7 = sld [smem:[#allocation0]]
  $region34: #{tpu_custom_call.1} parent=0
    _
  %s9 = ssub.s32 1, %s7
  %s10 = scalar_select 0, %s9, %s7
  // Predicated region
  $region2: #{tpu_custom_call.1} parent=0 // pred_check
    _
  $region3: #{tpu_custom_call.1} parent=0 // pred_check_branch
    %12 = sbr.rel (0) target = $region5
  $region4: #{tpu_custom_call.1} parent=0 // pred_region
    _
  $region5: #{tpu_custom_call.1} parent=0 // pred_fallthru
    _
  // Predicated region
  $region6: #{tpu_custom_call.1} parent=0 // pred_check
    _
  $region7: #{tpu_custom_call.1} parent=0 // pred_check_branch
    %14 = sbr.rel (0) target = $region9
  $region8: #{tpu_custom_call.1} parent=0 // pred_region
    _
  $region9: #{tpu_custom_call.1} parent=0 // pred_fallthru
    _
  // Predicated region
  $region10: #{tpu_custom_call.1} parent=0 // pred_check
    _
  $region11: #{tpu_custom_call.1} parent=0 // pred_check_branch
    %16 = sbr.rel (0) target = $region13
  $region12: #{tpu_custom_call.1} parent=0 // pred_region
    _
  $region13: #{tpu_custom_call.1} parent=0 // pred_fallthru
    _
  // Predicated region
  $region14: #{tpu_custom_call.1} parent=0 // pred_check
    _
  $region15: #{tpu_custom_call.1} parent=0 // pred_check_branch
    %18 = sbr.rel (0) target = $region17
  $region16: #{tpu_custom_call.1} parent=0 // pred_region
    _
  $region17: #{tpu_custom_call.1} parent=0 // pred_fallthru
    _
  // Predicated region
  $region18: #{tpu_custom_call.1} parent=0 // pred_check
    _
  $region19: #{tpu_custom_call.1} parent=0 // pred_check_branch
    %20 = sbr.rel (0) target = $region21
  $region20: #{tpu_custom_call.1} parent=0 // pred_region
    _
  $region21: #{tpu_custom_call.1} parent=0 // pred_fallthru
    _
  // Predicated region
  $region22: #{tpu_custom_call.1} parent=0 // pred_check
    _
  $region23: #{tpu_custom_call.1} parent=0 // pred_check_branch
    %22 = sbr.rel (0) target = $region25
  $region24: #{tpu_custom_call.1} parent=0 // pred_region
    _
  $region25: #{tpu_custom_call.1} parent=0 // pred_fallthru
    _
  %v23 = vld [vmem:[%s1] sm:$0xf]
  %v24 = vld [vmem:[%s2] sm:$0xff]
  %v25 = vld [vmem:[%s2 + $0x8] sm:$0xff]
  %v26 = vld [vmem:[%s2 + $0x10] sm:$0xff]
  %v27 = vld [vmem:[%s2 + $0x18] sm:$0xff]
  %v28 = vld [vmem:[%s2 + $0x20] sm:$0xff]
  %v29 = vld [vmem:[%s2 + $0x28] sm:$0xff]
  %v30 = vld [vmem:[%s2 + $0x30] sm:$0xff]
  %v31 = vld [vmem:[%s2 + $0x38] sm:$0xff]
  %v32 = vld [vmem:[%s2 + $0x40] sm:$0xff]
  %v33 = vld [vmem:[%s2 + $0x48] sm:$0xff]
  %v34 = vld [vmem:[%s2 + $0x50] sm:$0xff]
  %v35 = vld [vmem:[%s2 + $0x58] sm:$0xff]
  %v36 = vld [vmem:[%s2 + $0x60] sm:$0xff]
  %v37 = vld [vmem:[%s2 + $0x68] sm:$0xff]
  %v38 = vld [vmem:[%s2 + $0x70] sm:$0xff]
  %v39 = vld [vmem:[%s2 + $0x78] sm:$0xff]
  %v40 = vld [vmem:[%s3] sm:$0xff]
  %v41 = vld [vmem:[%s3 + $0x8] sm:$0xff]
  %v42 = vld [vmem:[%s3 + $0x10] sm:$0xff]
  %v43 = vld [vmem:[%s3 + $0x18] sm:$0xff]
  %v44 = vld [vmem:[%s3 + $0x20] sm:$0xff]
  %v45 = vld [vmem:[%s3 + $0x28] sm:$0xff]
  %v46 = vld [vmem:[%s3 + $0x30] sm:$0xff]
  %v47 = vld [vmem:[%s3 + $0x38] sm:$0xff]
  %v48 = vld [vmem:[%s3 + $0x40] sm:$0xff]
  %v49 = vld [vmem:[%s3 + $0x48] sm:$0xff]
  %v50 = vld [vmem:[%s3 + $0x50] sm:$0xff]
  %v51 = vld [vmem:[%s3 + $0x58] sm:$0xff]
  %v52 = vld [vmem:[%s3 + $0x60] sm:$0xff]
  %v53 = vld [vmem:[%s3 + $0x68] sm:$0xff]
  %v54 = vld [vmem:[%s3 + $0x70] sm:$0xff]
  %v55 = vld [vmem:[%s3 + $0x78] sm:$0xff]
  %v56 = vld [vmem:[%s4] sm:$0xff]
  %v57 = vld [vmem:[%s4 + $0x10] sm:$0xff]
  %v58 = vld [vmem:[%s4 + $0x20] sm:$0xff]
  %v59 = vld [vmem:[%s4 + $0x30] sm:$0xff]
  %v60 = vld [vmem:[%s4 + $0x8] sm:$0xff]
  %v61 = vld [vmem:[%s4 + $0x18] sm:$0xff]
  %v62 = vld [vmem:[%s4 + $0x28] sm:$0xff]
  %v63 = vld [vmem:[%s4 + $0x38] sm:$0xff]
  %v64 = vld [vmem:[%s5] sm:$0x1]
  %v65 = vld [vmem:[%s5] sm:$0x3]
  %v66 = vld [vmem:[%s5 + $0x1] sm:$0x1]
  %v67 = vld [vmem:[%s0] sm:$0xff]
  %v68 = vld [vmem:[%s0 + $0x8] sm:$0xff]
  %v69 = vld [vmem:[%s0 + $0x10] sm:$0xff]
  %v70 = vld [vmem:[%s0 + $0x18] sm:$0xff]
  %v71 = vld [vmem:[%s0 + $0x20] sm:$0xff]
  %v72 = vld [vmem:[%s0 + $0x28] sm:$0xff]
  %v73 = vld [vmem:[%s0 + $0x30] sm:$0xff]
  %v74 = vld [vmem:[%s0 + $0x38] sm:$0xff]
  %vm75 = vcmask 31744
  %v77 = vsel %vm75, %v67, 0
  %v80 = vsel %vm75, %v68, 0
  %v83 = vsel %vm75, %v69, 0
  %v86 = vsel %vm75, %v70, 0
  %v89 = vsel %vm75, %v71, 0
  %v92 = vsel %vm75, %v72, 0
  %v95 = vsel %vm75, %v73, 0
  %v98 = vsel %vm75, %v74, 0
  %vm100 = vcmask 1043456
  %v102 = vsel %vm100, %v23, 0
  %104 = vmatpush.msra.mxu0 0.0
  %105 = vmatpush.msra.mxu0 0.0
  %106 = vmatpush.msra.mxu0 0.0
  %107 = vmatpush.msra.mxu0 0.0
  %108 = vmatpush.msra.mxu0 0.0
  %109 = vmatpush.msra.mxu0 0.0
  %110 = vmatpush.msra.mxu0 0.0
  %111 = vmatpush.msra.mxu0 0.0
  %112 = vmatpush.msra.mxu0 0.0
  %113 = vmatpush.msra.mxu0 0.0
  %114 = vmatpush.msra.mxu0 0.0
  %115 = vmatpush.msra.mxu0 0.0
  %116 = vmatpush.msra.mxu0 0.0
  %117 = vmatpush.msra.mxu0 0.0
  %118 = vmatpush.msra.mxu0 0.0
  %119 = vmatpush.msra.mxu0 %v102
  %120 = vmatmul.f32.gmra.mxu0 %v77
  %v121 = vpop.f32.mrf.mxu0
  %v122 = vadd.f32 0.0, %v121
  %123 = vmatmul.f32.gmra.mxu0 %v80
  %v124 = vpop.f32.mrf.mxu0
  %v125 = vadd.f32 0.0, %v124
  %126 = vmatmul.f32.gmra.mxu0 %v83
  %v127 = vpop.f32.mrf.mxu0
  %v128 = vadd.f32 0.0, %v127
  %129 = vmatmul.f32.gmra.mxu0 %v86
  %v130 = vpop.f32.mrf.mxu0
  %v131 = vadd.f32 0.0, %v130
  %132 = vmatmul.f32.gmra.mxu0 %v89
  %v133 = vpop.f32.mrf.mxu0
  %v134 = vadd.f32 0.0, %v133
  %135 = vmatmul.f32.gmra.mxu0 %v92
  %v136 = vpop.f32.mrf.mxu0
  %v137 = vadd.f32 0.0, %v136
  %138 = vmatmul.f32.gmra.mxu0 %v95
  %v139 = vpop.f32.mrf.mxu0
  %v140 = vadd.f32 0.0, %v139
  %141 = vmatmul.f32.gmra.mxu0 %v98
  %v142 = vpop.f32.mrf.mxu0
  %v143 = vadd.f32 0.0, %v142
  %144 = vdwg.mxu0
  %vm145 = vcmask 523264
  %v147 = vsel %vm145, %v24, 0
  %v150 = vsel %vm145, %v25, 0
  %v153 = vsel %vm145, %v26, 0
  %v156 = vsel %vm145, %v27, 0
  %v159 = vsel %vm145, %v28, 0
  %v162 = vsel %vm145, %v29, 0
  %v165 = vsel %vm145, %v30, 0
  %v168 = vsel %vm145, %v31, 0
  %v171 = vsel %vm145, %v32, 0
  %v174 = vsel %vm145, %v33, 0
  %v177 = vsel %vm145, %v34, 0
  %v180 = vsel %vm145, %v35, 0
  %v183 = vsel %vm145, %v36, 0
  %v186 = vsel %vm145, %v37, 0
  %v189 = vsel %vm145, %v38, 0
  %v192 = vsel %vm145, %v39, 0
  %194 = vmatpush.msra.mxu0 0.0
  %195 = vmatpush.msra.mxu0 0.0
  %196 = vmatpush.msra.mxu0 0.0
  %197 = vmatpush.msra.mxu0 0.0
  %198 = vmatpush.msra.mxu0 0.0
  %199 = vmatpush.msra.mxu0 0.0
  %200 = vmatpush.msra.mxu0 0.0
  %201 = vmatpush.msra.mxu0 0.0
  %202 = vmatpush.msra.mxu0 %v143
  %203 = vmatpush.msra.mxu0 %v140
  %204 = vmatpush.msra.mxu0 %v137
  %205 = vmatpush.msra.mxu0 %v134
  %206 = vmatpush.msra.mxu0 %v131
  %207 = vmatpush.msra.mxu0 %v128
  %208 = vmatpush.msra.mxu0 %v125
  %209 = vmatpush.msra.mxu0 %v122
  %210 = vmatmul.f32.gmra.mxu0 %v147
  %v211 = vpop.f32.mrf.mxu0
  %v212 = vadd.f32 %v40, %v211
  %213 = vmatmul.f32.gmra.mxu0 %v150
  %v214 = vpop.f32.mrf.mxu0
  %v215 = vadd.f32 %v41, %v214
  %216 = vmatmul.f32.gmra.mxu0 %v153
  %v217 = vpop.f32.mrf.mxu0
  %v218 = vadd.f32 %v42, %v217
  %219 = vmatmul.f32.gmra.mxu0 %v156
  %v220 = vpop.f32.mrf.mxu0
  %v221 = vadd.f32 %v43, %v220
  %222 = vmatmul.f32.gmra.mxu0 %v159
  %v223 = vpop.f32.mrf.mxu0
  %v224 = vadd.f32 %v44, %v223
  %225 = vmatmul.f32.gmra.mxu0 %v162
  %v226 = vpop.f32.mrf.mxu0
  %v227 = vadd.f32 %v45, %v226
  %228 = vmatmul.f32.gmra.mxu0 %v165
  %v229 = vpop.f32.mrf.mxu0
  %v230 = vadd.f32 %v46, %v229
  %231 = vmatmul.f32.gmra.mxu0 %v168
  %v232 = vpop.f32.mrf.mxu0
  %v233 = vadd.f32 %v47, %v232
  %234 = vmatmul.f32.gmra.mxu0 %v171
  %v235 = vpop.f32.mrf.mxu0
  %v236 = vadd.f32 %v48, %v235
  %237 = vmatmul.f32.gmra.mxu0 %v174
  %v238 = vpop.f32.mrf.mxu0
  %v239 = vadd.f32 %v49, %v238
  %240 = vmatmul.f32.gmra.mxu0 %v177
  %v241 = vpop.f32.mrf.mxu0
  %v242 = vadd.f32 %v50, %v241
  %243 = vmatmul.f32.gmra.mxu0 %v180
  %v244 = vpop.f32.mrf.mxu0
  %v245 = vadd.f32 %v51, %v244
  %246 = vmatmul.f32.gmra.mxu0 %v183
  %v247 = vpop.f32.mrf.mxu0
  %v248 = vadd.f32 %v52, %v247
  %249 = vmatmul.f32.gmra.mxu0 %v186
  %v250 = vpop.f32.mrf.mxu0
  %v251 = vadd.f32 %v53, %v250
  %252 = vmatmul.f32.gmra.mxu0 %v189
  %v253 = vpop.f32.mrf.mxu0
  %v254 = vadd.f32 %v54, %v253
  %255 = vmatmul.f32.gmra.mxu0 %v192
  %v256 = vpop.f32.mrf.mxu0
  %v257 = vadd.f32 %v55, %v256
  %258 = vdwg.mxu0
  %vm259 = vcmask 261120
  %v261 = vsel %vm259, 0.0, 0
  %263 = vmatpush.msra.mxu0 0.0
  %264 = vmatpush.msra.mxu0 0.0
  %265 = vmatpush.msra.mxu0 0.0
  %266 = vmatpush.msra.mxu0 0.0
  %267 = vmatpush.msra.mxu0 0.0
  %268 = vmatpush.msra.mxu0 0.0
  %269 = vmatpush.msra.mxu0 0.0
  %270 = vmatpush.msra.mxu0 0.0
  %271 = vmatpush.msra.mxu0 0.0
  %272 = vmatpush.msra.mxu0 0.0
  %273 = vmatpush.msra.mxu0 0.0
  %274 = vmatpush.msra.mxu0 0.0
  %275 = vmatpush.msra.mxu0 %v59
  %276 = vmatpush.msra.mxu0 %v58
  %277 = vmatpush.msra.mxu0 %v57
  %278 = vmatpush.msra.mxu0 %v56
  %279 = vmatmul.f32.gmra.mxu0 %v261
  %v280 = vpop.f32.mrf.mxu0
  %v281 = vadd.f32 0.0, %v280
  %282 = vdwg.mxu0
  %v283 = vadd.f32 %v212, %v281
  %v284 = vxor.u32 %v283, 2147483648
  %v285 = vmul.f32 %v284, 1.442695
  %v286 = vpow.pop %v285
  %v287 = vadd.f32 %v286, 1.0
  %v288 = vrcp.pop %v287
  %v289 = vmul.f32 %v287, %v288
  %v290 = vsub.f32 1.0, %v289
  %v291 = vmul.f32 %v288, %v290
  %v292 = vadd.f32 %v288, %v291
  %vm293 = vweird.f32 %v287
  %vm294 = vweird.f32 %v288
  %vm295 = vmor %vm293, %vm294
  %v296 = vsel %vm295, %v288, %v292
  %v297 = vand.u32 2147483647, %v287
  %vm298 = vcmp.eq.f32.partialorder %v297, 8.507059e+37
  %v299 = vand.u32 %v287, 2147483648
  %v300 = vor.u32 1.1754944e-38, %v299
  %v301 = vsel %vm298, %v300, %v296
  %v302 = vmul.f32 1.0, %v301
  %v304 = vperm.slane %v64, 0
  %v306 = vadd.f32 %v281, %v304
  %308 = vrot.lane.b32.xlu0 %v306, 64
  %v309 = vpop.permute.xlu0 %308
  %v311 = vmul.f32 %v302, %v309
  %313 = vrot.lane.b32.xlu0 %v311, 64
  %v314 = vpop.permute.xlu0 %313
  %v316 = vadd.f32 %v212, %v314
  %v317 = vtanh.pop %v316
  %v318 = vsub.f32 1.0, %v302
  %320 = vrot.lane.b32.xlu0 %v317, 96
  %v321 = vpop.permute.xlu0 %320
  %v323 = vmul.f32 %v318, %v321
  %v324 = vmul.f32 %v302, 0.0
  %v325 = vadd.f32 %v323, %v324
  %327 = vrot.lane.b32.xlu0 %v325, 96
  %v328 = vpop.permute.xlu0 %327
  %v329 = vsel %vm259, %v328, 0
  %331 = vmatpush.msra.mxu0 0.0
  %332 = vmatpush.msra.mxu0 0.0
  %333 = vmatpush.msra.mxu0 0.0
  %334 = vmatpush.msra.mxu0 0.0
  %335 = vmatpush.msra.mxu0 0.0
  %336 = vmatpush.msra.mxu0 0.0
  %337 = vmatpush.msra.mxu0 0.0
  %338 = vmatpush.msra.mxu0 0.0
  %339 = vmatpush.msra.mxu0 0.0
  %340 = vmatpush.msra.mxu0 0.0
  %341 = vmatpush.msra.mxu0 0.0
  %342 = vmatpush.msra.mxu0 0.0
  %343 = vmatpush.msra.mxu0 %v59
  %344 = vmatpush.msra.mxu0 %v58
  %345 = vmatpush.msra.mxu0 %v57
  %346 = vmatpush.msra.mxu0 %v56
  %347 = vmatmul.f32.gmra.mxu0 %v329
  %v348 = vpop.f32.mrf.mxu0
  %v349 = vadd.f32 0.0, %v348
  %350 = vdwg.mxu0
  %v351 = vadd.f32 %v215, %v349
  %v352 = vxor.u32 %v351, 2147483648
  %v353 = vmul.f32 %v352, 1.442695
  %v354 = vpow.pop %v353
  %v355 = vadd.f32 %v354, 1.0
  %v356 = vrcp.pop %v355
  %v357 = vmul.f32 %v355, %v356
  %v358 = vsub.f32 1.0, %v357
  %v359 = vmul.f32 %v356, %v358
  %v360 = vadd.f32 %v356, %v359
  %vm361 = vweird.f32 %v355
  %vm362 = vweird.f32 %v356
  %vm363 = vmor %vm361, %vm362
  %v364 = vsel %vm363, %v356, %v360
  %v365 = vand.u32 2147483647, %v355
  %vm366 = vcmp.eq.f32.partialorder %v365, 8.507059e+37
  %v367 = vand.u32 %v355, 2147483648
  %v368 = vor.u32 1.1754944e-38, %v367
  %v369 = vsel %vm366, %v368, %v364
  %v370 = vmul.f32 1.0, %v369
  %v371 = vadd.f32 %v349, %v304
  %373 = vrot.lane.b32.xlu0 %v371, 64
  %v374 = vpop.permute.xlu0 %373
  %v376 = vmul.f32 %v370, %v374
  %378 = vrot.lane.b32.xlu0 %v376, 64
  %v379 = vpop.permute.xlu0 %378
  %v381 = vadd.f32 %v215, %v379
  %v382 = vtanh.pop %v381
  %v383 = vsub.f32 1.0, %v370
  %385 = vrot.lane.b32.xlu0 %v382, 96
  %v386 = vpop.permute.xlu0 %385
  %v388 = vmul.f32 %v383, %v386
  %v389 = vmul.f32 %v370, %v325
  %v390 = vadd.f32 %v388, %v389
  %392 = vrot.lane.b32.xlu0 %v390, 96
  %v393 = vpop.permute.xlu0 %392
  %v394 = vsel %vm259, %v393, 0
  %396 = vmatpush.msra.mxu0 0.0
  %397 = vmatpush.msra.mxu0 0.0
  %398 = vmatpush.msra.mxu0 0.0
  %399 = vmatpush.msra.mxu0 0.0
  %400 = vmatpush.msra.mxu0 0.0
  %401 = vmatpush.msra.mxu0 0.0
  %402 = vmatpush.msra.mxu0 0.0
  %403 = vmatpush.msra.mxu0 0.0
  %404 = vmatpush.msra.mxu0 0.0
  %405 = vmatpush.msra.mxu0 0.0
  %406 = vmatpush.msra.mxu0 0.0
  %407 = vmatpush.msra.mxu0 0.0
  %408 = vmatpush.msra.mxu0 %v59
  %409 = vmatpush.msra.mxu0 %v58
  %410 = vmatpush.msra.mxu0 %v57
  %411 = vmatpush.msra.mxu0 %v56
  %412 = vmatmul.f32.gmra.mxu0 %v394
  %v413 = vpop.f32.mrf.mxu0
  %v414 = vadd.f32 0.0, %v413
  %415 = vdwg.mxu0
  %v416 = vadd.f32 %v218, %v414
  %v417 = vxor.u32 %v416, 2147483648
  %v418 = vmul.f32 %v417, 1.442695
  %v419 = vpow.pop %v418
  %v420 = vadd.f32 %v419, 1.0
  %v421 = vrcp.pop %v420
  %v422 = vmul.f32 %v420, %v421
  %v423 = vsub.f32 1.0, %v422
  %v424 = vmul.f32 %v421, %v423
  %v425 = vadd.f32 %v421, %v424
  %vm426 = vweird.f32 %v420
  %vm427 = vweird.f32 %v421
  %vm428 = vmor %vm426, %vm427
  %v429 = vsel %vm428, %v421, %v425
  %v430 = vand.u32 2147483647, %v420
  %vm431 = vcmp.eq.f32.partialorder %v430, 8.507059e+37
  %v432 = vand.u32 %v420, 2147483648
  %v433 = vor.u32 1.1754944e-38, %v432
  %v434 = vsel %vm431, %v433, %v429
  %v435 = vmul.f32 1.0, %v434
  %v436 = vadd.f32 %v414, %v304
  %438 = vrot.lane.b32.xlu0 %v436, 64
  %v439 = vpop.permute.xlu0 %438
  %v441 = vmul.f32 %v435, %v439
  %443 = vrot.lane.b32.xlu0 %v441, 64
  %v444 = vpop.permute.xlu0 %443
  %v446 = vadd.f32 %v218, %v444
  %v447 = vtanh.pop %v446
  %v448 = vsub.f32 1.0, %v435
  %450 = vrot.lane.b32.xlu0 %v447, 96
  %v451 = vpop.permute.xlu0 %450
  %v453 = vmul.f32 %v448, %v451
  %v454 = vmul.f32 %v435, %v390
  %v455 = vadd.f32 %v453, %v454
  %457 = vrot.lane.b32.xlu0 %v455, 96
  %v458 = vpop.permute.xlu0 %457
  %v459 = vsel %vm259, %v458, 0
  %461 = vmatpush.msra.mxu0 0.0
  %462 = vmatpush.msra.mxu0 0.0
  %463 = vmatpush.msra.mxu0 0.0
  %464 = vmatpush.msra.mxu0 0.0
  %465 = vmatpush.msra.mxu0 0.0
  %466 = vmatpush.msra.mxu0 0.0
  %467 = vmatpush.msra.mxu0 0.0
  %468 = vmatpush.msra.mxu0 0.0
  %469 = vmatpush.msra.mxu0 0.0
  %470 = vmatpush.msra.mxu0 0.0
  %471 = vmatpush.msra.mxu0 0.0
  %472 = vmatpush.msra.mxu0 0.0
  %473 = vmatpush.msra.mxu0 %v59
  %474 = vmatpush.msra.mxu0 %v58
  %475 = vmatpush.msra.mxu0 %v57
  %476 = vmatpush.msra.mxu0 %v56
  %477 = vmatmul.f32.gmra.mxu0 %v459
  %v478 = vpop.f32.mrf.mxu0
  %v479 = vadd.f32 0.0, %v478
  %480 = vdwg.mxu0
  %v481 = vadd.f32 %v221, %v479
  %v482 = vxor.u32 %v481, 2147483648
  %v483 = vmul.f32 %v482, 1.442695
  %v484 = vpow.pop %v483
  %v485 = vadd.f32 %v484, 1.0
  %v486 = vrcp.pop %v485
  %v487 = vmul.f32 %v485, %v486
  %v488 = vsub.f32 1.0, %v487
  %v489 = vmul.f32 %v486, %v488
  %v490 = vadd.f32 %v486, %v489
  %vm491 = vweird.f32 %v485
  %vm492 = vweird.f32 %v486
  %vm493 = vmor %vm491, %vm492
  %v494 = vsel %vm493, %v486, %v490
  %v495 = vand.u32 2147483647, %v485
  %vm496 = vcmp.eq.f32.partialorder %v495, 8.507059e+37
  %v497 = vand.u32 %v485, 2147483648
  %v498 = vor.u32 1.1754944e-38, %v497
  %v499 = vsel %vm496, %v498, %v494
  %v500 = vmul.f32 1.0, %v499
  %v501 = vadd.f32 %v479, %v304
  %503 = vrot.lane.b32.xlu0 %v501, 64
  %v504 = vpop.permute.xlu0 %503
  %v506 = vmul.f32 %v500, %v504
  %508 = vrot.lane.b32.xlu0 %v506, 64
  %v509 = vpop.permute.xlu0 %508
  %v511 = vadd.f32 %v221, %v509
  %v512 = vtanh.pop %v511
  %v513 = vsub.f32 1.0, %v500
  %515 = vrot.lane.b32.xlu0 %v512, 96
  %v516 = vpop.permute.xlu0 %515
  %v518 = vmul.f32 %v513, %v516
  %v519 = vmul.f32 %v500, %v455
  %v520 = vadd.f32 %v518, %v519
  %522 = vrot.lane.b32.xlu0 %v520, 96
  %v523 = vpop.permute.xlu0 %522
  %v524 = vsel %vm259, %v523, 0
  %526 = vmatpush.msra.mxu0 0.0
  %527 = vmatpush.msra.mxu0 0.0
  %528 = vmatpush.msra.mxu0 0.0
  %529 = vmatpush.msra.mxu0 0.0
  %530 = vmatpush.msra.mxu0 0.0
  %531 = vmatpush.msra.mxu0 0.0
  %532 = vmatpush.msra.mxu0 0.0
  %533 = vmatpush.msra.mxu0 0.0
  %534 = vmatpush.msra.mxu0 0.0
  %535 = vmatpush.msra.mxu0 0.0
  %536 = vmatpush.msra.mxu0 0.0
  %537 = vmatpush.msra.mxu0 0.0
  %538 = vmatpush.msra.mxu0 %v59
  %539 = vmatpush.msra.mxu0 %v58
  %540 = vmatpush.msra.mxu0 %v57
  %541 = vmatpush.msra.mxu0 %v56
  %542 = vmatmul.f32.gmra.mxu0 %v524
  %v543 = vpop.f32.mrf.mxu0
  %v544 = vadd.f32 0.0, %v543
  %545 = vdwg.mxu0
  %v546 = vadd.f32 %v224, %v544
  %v547 = vxor.u32 %v546, 2147483648
  %v548 = vmul.f32 %v547, 1.442695
  %v549 = vpow.pop %v548
  %v550 = vadd.f32 %v549, 1.0
  %v551 = vrcp.pop %v550
  %v552 = vmul.f32 %v550, %v551
  %v553 = vsub.f32 1.0, %v552
  %v554 = vmul.f32 %v551, %v553
  %v555 = vadd.f32 %v551, %v554
  %vm556 = vweird.f32 %v550
  %vm557 = vweird.f32 %v551
  %vm558 = vmor %vm556, %vm557
  %v559 = vsel %vm558, %v551, %v555
  %v560 = vand.u32 2147483647, %v550
  %vm561 = vcmp.eq.f32.partialorder %v560, 8.507059e+37
  %v562 = vand.u32 %v550, 2147483648
  %v563 = vor.u32 1.1754944e-38, %v562
  %v564 = vsel %vm561, %v563, %v559
  %v565 = vmul.f32 1.0, %v564
  %v566 = vadd.f32 %v544, %v304
  %568 = vrot.lane.b32.xlu0 %v566, 64
  %v569 = vpop.permute.xlu0 %568
  %v571 = vmul.f32 %v565, %v569
  %573 = vrot.lane.b32.xlu0 %v571, 64
  %v574 = vpop.permute.xlu0 %573
  %v576 = vadd.f32 %v224, %v574
  %v577 = vtanh.pop %v576
  %v578 = vsub.f32 1.0, %v565
  %580 = vrot.lane.b32.xlu0 %v577, 96
  %v581 = vpop.permute.xlu0 %580
  %v583 = vmul.f32 %v578, %v581
  %v584 = vmul.f32 %v565, %v520
  %v585 = vadd.f32 %v583, %v584
  %587 = vrot.lane.b32.xlu0 %v585, 96
  %v588 = vpop.permute.xlu0 %587
  %v589 = vsel %vm259, %v588, 0
  %591 = vmatpush.msra.mxu0 0.0
  %592 = vmatpush.msra.mxu0 0.0
  %593 = vmatpush.msra.mxu0 0.0
  %594 = vmatpush.msra.mxu0 0.0
  %595 = vmatpush.msra.mxu0 0.0
  %596 = vmatpush.msra.mxu0 0.0
  %597 = vmatpush.msra.mxu0 0.0
  %598 = vmatpush.msra.mxu0 0.0
  %599 = vmatpush.msra.mxu0 0.0
  %600 = vmatpush.msra.mxu0 0.0
  %601 = vmatpush.msra.mxu0 0.0
  %602 = vmatpush.msra.mxu0 0.0
  %603 = vmatpush.msra.mxu0 %v59
  %604 = vmatpush.msra.mxu0 %v58
  %605 = vmatpush.msra.mxu0 %v57
  %606 = vmatpush.msra.mxu0 %v56
  %607 = vmatmul.f32.gmra.mxu0 %v589
  %v608 = vpop.f32.mrf.mxu0
  %v609 = vadd.f32 0.0, %v608
  %610 = vdwg.mxu0
  %v611 = vadd.f32 %v227, %v609
  %v612 = vxor.u32 %v611, 2147483648
  %v613 = vmul.f32 %v612, 1.442695
  %v614 = vpow.pop %v613
  %v615 = vadd.f32 %v614, 1.0
  %v616 = vrcp.pop %v615
  %v617 = vmul.f32 %v615, %v616
  %v618 = vsub.f32 1.0, %v617
  %v619 = vmul.f32 %v616, %v618
  %v620 = vadd.f32 %v616, %v619
  %vm621 = vweird.f32 %v615
  %vm622 = vweird.f32 %v616
  %vm623 = vmor %vm621, %vm622
  %v624 = vsel %vm623, %v616, %v620
  %v625 = vand.u32 2147483647, %v615
  %vm626 = vcmp.eq.f32.partialorder %v625, 8.507059e+37
  %v627 = vand.u32 %v615, 2147483648
  %v628 = vor.u32 1.1754944e-38, %v627
  %v629 = vsel %vm626, %v628, %v624
  %v630 = vmul.f32 1.0, %v629
  %v631 = vadd.f32 %v609, %v304
  %633 = vrot.lane.b32.xlu0 %v631, 64
  %v634 = vpop.permute.xlu0 %633
  %v636 = vmul.f32 %v630, %v634
  %638 = vrot.lane.b32.xlu0 %v636, 64
  %v639 = vpop.permute.xlu0 %638
  %v641 = vadd.f32 %v227, %v639
  %v642 = vtanh.pop %v641
  %v643 = vsub.f32 1.0, %v630
  %645 = vrot.lane.b32.xlu0 %v642, 96
  %v646 = vpop.permute.xlu0 %645
  %v648 = vmul.f32 %v643, %v646
  %v649 = vmul.f32 %v630, %v585
  %v650 = vadd.f32 %v648, %v649
  %652 = vrot.lane.b32.xlu0 %v650, 96
  %v653 = vpop.permute.xlu0 %652
  %v654 = vsel %vm259, %v653, 0
  %656 = vmatpush.msra.mxu0 0.0
  %657 = vmatpush.msra.mxu0 0.0
  %658 = vmatpush.msra.mxu0 0.0
  %659 = vmatpush.msra.mxu0 0.0
  %660 = vmatpush.msra.mxu0 0.0
  %661 = vmatpush.msra.mxu0 0.0
  %662 = vmatpush.msra.mxu0 0.0
  %663 = vmatpush.msra.mxu0 0.0
  %664 = vmatpush.msra.mxu0 0.0
  %665 = vmatpush.msra.mxu0 0.0
  %666 = vmatpush.msra.mxu0 0.0
  %667 = vmatpush.msra.mxu0 0.0
  %668 = vmatpush.msra.mxu0 %v59
  %669 = vmatpush.msra.mxu0 %v58
  %670 = vmatpush.msra.mxu0 %v57
  %671 = vmatpush.msra.mxu0 %v56
  %672 = vmatmul.f32.gmra.mxu0 %v654
  %v673 = vpop.f32.mrf.mxu0
  %v674 = vadd.f32 0.0, %v673
  %675 = vdwg.mxu0
  %v676 = vadd.f32 %v230, %v674
  %v677 = vxor.u32 %v676, 2147483648
  %v678 = vmul.f32 %v677, 1.442695
  %v679 = vpow.pop %v678
  %v680 = vadd.f32 %v679, 1.0
  %v681 = vrcp.pop %v680
  %v682 = vmul.f32 %v680, %v681
  %v683 = vsub.f32 1.0, %v682
  %v684 = vmul.f32 %v681, %v683
  %v685 = vadd.f32 %v681, %v684
  %vm686 = vweird.f32 %v680
  %vm687 = vweird.f32 %v681
  %vm688 = vmor %vm686, %vm687
  %v689 = vsel %vm688, %v681, %v685
  %v690 = vand.u32 2147483647, %v680
  %vm691 = vcmp.eq.f32.partialorder %v690, 8.507059e+37
  %v692 = vand.u32 %v680, 2147483648
  %v693 = vor.u32 1.1754944e-38, %v692
  %v694 = vsel %vm691, %v693, %v689
  %v695 = vmul.f32 1.0, %v694
  %v696 = vadd.f32 %v674, %v304
  %698 = vrot.lane.b32.xlu0 %v696, 64
  %v699 = vpop.permute.xlu0 %698
  %v701 = vmul.f32 %v695, %v699
  %703 = vrot.lane.b32.xlu0 %v701, 64
  %v704 = vpop.permute.xlu0 %703
  %v706 = vadd.f32 %v230, %v704
  %v707 = vtanh.pop %v706
  %v708 = vsub.f32 1.0, %v695
  %710 = vrot.lane.b32.xlu0 %v707, 96
  %v711 = vpop.permute.xlu0 %710
  %v713 = vmul.f32 %v708, %v711
  %v714 = vmul.f32 %v695, %v650
  %v715 = vadd.f32 %v713, %v714
  %717 = vrot.lane.b32.xlu0 %v715, 96
  %v718 = vpop.permute.xlu0 %717
  %v719 = vsel %vm259, %v718, 0
  %721 = vmatpush.msra.mxu0 0.0
  %722 = vmatpush.msra.mxu0 0.0
  %723 = vmatpush.msra.mxu0 0.0
  %724 = vmatpush.msra.mxu0 0.0
  %725 = vmatpush.msra.mxu0 0.0
  %726 = vmatpush.msra.mxu0 0.0
  %727 = vmatpush.msra.mxu0 0.0
  %728 = vmatpush.msra.mxu0 0.0
  %729 = vmatpush.msra.mxu0 0.0
  %730 = vmatpush.msra.mxu0 0.0
  %731 = vmatpush.msra.mxu0 0.0
  %732 = vmatpush.msra.mxu0 0.0
  %733 = vmatpush.msra.mxu0 %v59
  %734 = vmatpush.msra.mxu0 %v58
  %735 = vmatpush.msra.mxu0 %v57
  %736 = vmatpush.msra.mxu0 %v56
  %737 = vmatmul.f32.gmra.mxu0 %v719
  %v738 = vpop.f32.mrf.mxu0
  %v739 = vadd.f32 0.0, %v738
  %740 = vdwg.mxu0
  %v741 = vadd.f32 %v233, %v739
  %v742 = vxor.u32 %v741, 2147483648
  %v743 = vmul.f32 %v742, 1.442695
  %v744 = vpow.pop %v743
  %v745 = vadd.f32 %v744, 1.0
  %v746 = vrcp.pop %v745
  %v747 = vmul.f32 %v745, %v746
  %v748 = vsub.f32 1.0, %v747
  %v749 = vmul.f32 %v746, %v748
  %v750 = vadd.f32 %v746, %v749
  %vm751 = vweird.f32 %v745
  %vm752 = vweird.f32 %v746
  %vm753 = vmor %vm751, %vm752
  %v754 = vsel %vm753, %v746, %v750
  %v755 = vand.u32 2147483647, %v745
  %vm756 = vcmp.eq.f32.partialorder %v755, 8.507059e+37
  %v757 = vand.u32 %v745, 2147483648
  %v758 = vor.u32 1.1754944e-38, %v757
  %v759 = vsel %vm756, %v758, %v754
  %v760 = vmul.f32 1.0, %v759
  %v761 = vadd.f32 %v739, %v304
  %763 = vrot.lane.b32.xlu0 %v761, 64
  %v764 = vpop.permute.xlu0 %763
  %v766 = vmul.f32 %v760, %v764
  %768 = vrot.lane.b32.xlu0 %v766, 64
  %v769 = vpop.permute.xlu0 %768
  %v771 = vadd.f32 %v233, %v769
  %v772 = vtanh.pop %v771
  %v773 = vsub.f32 1.0, %v760
  %775 = vrot.lane.b32.xlu0 %v772, 96
  %v776 = vpop.permute.xlu0 %775
  %v778 = vmul.f32 %v773, %v776
  %v779 = vmul.f32 %v760, %v715
  %v780 = vadd.f32 %v778, %v779
  %782 = vrot.lane.b32.xlu0 %v780, 96
  %v783 = vpop.permute.xlu0 %782
  %v784 = vsel %vm259, %v783, 0
  %786 = vmatpush.msra.mxu0 0.0
  %787 = vmatpush.msra.mxu0 0.0
  %788 = vmatpush.msra.mxu0 0.0
  %789 = vmatpush.msra.mxu0 0.0
  %790 = vmatpush.msra.mxu0 0.0
  %791 = vmatpush.msra.mxu0 0.0
  %792 = vmatpush.msra.mxu0 0.0
  %793 = vmatpush.msra.mxu0 0.0
  %794 = vmatpush.msra.mxu0 0.0
  %795 = vmatpush.msra.mxu0 0.0
  %796 = vmatpush.msra.mxu0 0.0
  %797 = vmatpush.msra.mxu0 0.0
  %798 = vmatpush.msra.mxu0 %v59
  %799 = vmatpush.msra.mxu0 %v58
  %800 = vmatpush.msra.mxu0 %v57
  %801 = vmatpush.msra.mxu0 %v56
  %802 = vmatmul.f32.gmra.mxu0 %v784
  %v803 = vpop.f32.mrf.mxu0
  %v804 = vadd.f32 0.0, %v803
  %805 = vdwg.mxu0
  %v806 = vadd.f32 %v236, %v804
  %v807 = vxor.u32 %v806, 2147483648
  %v808 = vmul.f32 %v807, 1.442695
  %v809 = vpow.pop %v808
  %v810 = vadd.f32 %v809, 1.0
  %v811 = vrcp.pop %v810
  %v812 = vmul.f32 %v810, %v811
  %v813 = vsub.f32 1.0, %v812
  %v814 = vmul.f32 %v811, %v813
  %v815 = vadd.f32 %v811, %v814
  %vm816 = vweird.f32 %v810
  %vm817 = vweird.f32 %v811
  %vm818 = vmor %vm816, %vm817
  %v819 = vsel %vm818, %v811, %v815
  %v820 = vand.u32 2147483647, %v810
  %vm821 = vcmp.eq.f32.partialorder %v820, 8.507059e+37
  %v822 = vand.u32 %v810, 2147483648
  %v823 = vor.u32 1.1754944e-38, %v822
  %v824 = vsel %vm821, %v823, %v819
  %v825 = vmul.f32 1.0, %v824
  %v826 = vadd.f32 %v804, %v304
  %828 = vrot.lane.b32.xlu0 %v826, 64
  %v829 = vpop.permute.xlu0 %828
  %v831 = vmul.f32 %v825, %v829
  %833 = vrot.lane.b32.xlu0 %v831, 64
  %v834 = vpop.permute.xlu0 %833
  %v836 = vadd.f32 %v236, %v834
  %v837 = vtanh.pop %v836
  %v838 = vsub.f32 1.0, %v825
  %840 = vrot.lane.b32.xlu0 %v837, 96
  %v841 = vpop.permute.xlu0 %840
  %v843 = vmul.f32 %v838, %v841
  %v844 = vmul.f32 %v825, %v780
  %v845 = vadd.f32 %v843, %v844
  %847 = vrot.lane.b32.xlu0 %v845, 96
  %v848 = vpop.permute.xlu0 %847
  %v849 = vsel %vm259, %v848, 0
  %851 = vmatpush.msra.mxu0 0.0
  %852 = vmatpush.msra.mxu0 0.0
  %853 = vmatpush.msra.mxu0 0.0
  %854 = vmatpush.msra.mxu0 0.0
  %855 = vmatpush.msra.mxu0 0.0
  %856 = vmatpush.msra.mxu0 0.0
  %857 = vmatpush.msra.mxu0 0.0
  %858 = vmatpush.msra.mxu0 0.0
  %859 = vmatpush.msra.mxu0 0.0
  %860 = vmatpush.msra.mxu0 0.0
  %861 = vmatpush.msra.mxu0 0.0
  %862 = vmatpush.msra.mxu0 0.0
  %863 = vmatpush.msra.mxu0 %v59
  %864 = vmatpush.msra.mxu0 %v58
  %865 = vmatpush.msra.mxu0 %v57
  %866 = vmatpush.msra.mxu0 %v56
  %867 = vmatmul.f32.gmra.mxu0 %v849
  %v868 = vpop.f32.mrf.mxu0
  %v869 = vadd.f32 0.0, %v868
  %870 = vdwg.mxu0
  %v871 = vadd.f32 %v239, %v869
  %v872 = vxor.u32 %v871, 2147483648
  %v873 = vmul.f32 %v872, 1.442695
  %v874 = vpow.pop %v873
  %v875 = vadd.f32 %v874, 1.0
  %v876 = vrcp.pop %v875
  %v877 = vmul.f32 %v875, %v876
  %v878 = vsub.f32 1.0, %v877
  %v879 = vmul.f32 %v876, %v878
  %v880 = vadd.f32 %v876, %v879
  %vm881 = vweird.f32 %v875
  %vm882 = vweird.f32 %v876
  %vm883 = vmor %vm881, %vm882
  %v884 = vsel %vm883, %v876, %v880
  %v885 = vand.u32 2147483647, %v875
  %vm886 = vcmp.eq.f32.partialorder %v885, 8.507059e+37
  %v887 = vand.u32 %v875, 2147483648
  %v888 = vor.u32 1.1754944e-38, %v887
  %v889 = vsel %vm886, %v888, %v884
  %v890 = vmul.f32 1.0, %v889
  %v891 = vadd.f32 %v869, %v304
  %893 = vrot.lane.b32.xlu0 %v891, 64
  %v894 = vpop.permute.xlu0 %893
  %v896 = vmul.f32 %v890, %v894
  %898 = vrot.lane.b32.xlu0 %v896, 64
  %v899 = vpop.permute.xlu0 %898
  %v901 = vadd.f32 %v239, %v899
  %v902 = vtanh.pop %v901
  %v903 = vsub.f32 1.0, %v890
  %905 = vrot.lane.b32.xlu0 %v902, 96
  %v906 = vpop.permute.xlu0 %905
  %v908 = vmul.f32 %v903, %v906
  %v909 = vmul.f32 %v890, %v845
  %v910 = vadd.f32 %v908, %v909
  %912 = vrot.lane.b32.xlu0 %v910, 96
  %v913 = vpop.permute.xlu0 %912
  %v914 = vsel %vm259, %v913, 0
  %916 = vmatpush.msra.mxu0 0.0
  %917 = vmatpush.msra.mxu0 0.0
  %918 = vmatpush.msra.mxu0 0.0
  %919 = vmatpush.msra.mxu0 0.0
  %920 = vmatpush.msra.mxu0 0.0
  %921 = vmatpush.msra.mxu0 0.0
  %922 = vmatpush.msra.mxu0 0.0
  %923 = vmatpush.msra.mxu0 0.0
  %924 = vmatpush.msra.mxu0 0.0
  %925 = vmatpush.msra.mxu0 0.0
  %926 = vmatpush.msra.mxu0 0.0
  %927 = vmatpush.msra.mxu0 0.0
  %928 = vmatpush.msra.mxu0 %v59
  %929 = vmatpush.msra.mxu0 %v58
  %930 = vmatpush.msra.mxu0 %v57
  %931 = vmatpush.msra.mxu0 %v56
  %932 = vmatmul.f32.gmra.mxu0 %v914
  %v933 = vpop.f32.mrf.mxu0
  %v934 = vadd.f32 0.0, %v933
  %935 = vdwg.mxu0
  %v936 = vadd.f32 %v242, %v934
  %v937 = vxor.u32 %v936, 2147483648
  %v938 = vmul.f32 %v937, 1.442695
  %v939 = vpow.pop %v938
  %v940 = vadd.f32 %v939, 1.0
  %v941 = vrcp.pop %v940
  %v942 = vmul.f32 %v940, %v941
  %v943 = vsub.f32 1.0, %v942
  %v944 = vmul.f32 %v941, %v943
  %v945 = vadd.f32 %v941, %v944
  %vm946 = vweird.f32 %v940
  %vm947 = vweird.f32 %v941
  %vm948 = vmor %vm946, %vm947
  %v949 = vsel %vm948, %v941, %v945
  %v950 = vand.u32 2147483647, %v940
  %vm951 = vcmp.eq.f32.partialorder %v950, 8.507059e+37
  %v952 = vand.u32 %v940, 2147483648
  %v953 = vor.u32 1.1754944e-38, %v952
  %v954 = vsel %vm951, %v953, %v949
  %v955 = vmul.f32 1.0, %v954
  %v956 = vadd.f32 %v934, %v304
  %958 = vrot.lane.b32.xlu0 %v956, 64
  %v959 = vpop.permute.xlu0 %958
  %v961 = vmul.f32 %v955, %v959
  %963 = vrot.lane.b32.xlu0 %v961, 64
  %v964 = vpop.permute.xlu0 %963
  %v966 = vadd.f32 %v242, %v964
  %v967 = vtanh.pop %v966
  %v968 = vsub.f32 1.0, %v955
  %970 = vrot.lane.b32.xlu0 %v967, 96
  %v971 = vpop.permute.xlu0 %970
  %v973 = vmul.f32 %v968, %v971
  %v974 = vmul.f32 %v955, %v910
  %v975 = vadd.f32 %v973, %v974
  %977 = vrot.lane.b32.xlu0 %v975, 96
  %v978 = vpop.permute.xlu0 %977
  %v979 = vsel %vm259, %v978, 0
  %981 = vmatpush.msra.mxu0 0.0
  %982 = vmatpush.msra.mxu0 0.0
  %983 = vmatpush.msra.mxu0 0.0
  %984 = vmatpush.msra.mxu0 0.0
  %985 = vmatpush.msra.mxu0 0.0
  %986 = vmatpush.msra.mxu0 0.0
  %987 = vmatpush.msra.mxu0 0.0
  %988 = vmatpush.msra.mxu0 0.0
  %989 = vmatpush.msra.mxu0 0.0
  %990 = vmatpush.msra.mxu0 0.0
  %991 = vmatpush.msra.mxu0 0.0
  %992 = vmatpush.msra.mxu0 0.0
  %993 = vmatpush.msra.mxu0 %v59
  %994 = vmatpush.msra.mxu0 %v58
  %995 = vmatpush.msra.mxu0 %v57
  %996 = vmatpush.msra.mxu0 %v56
  %997 = vmatmul.f32.gmra.mxu0 %v979
  %v998 = vpop.f32.mrf.mxu0
  %v999 = vadd.f32 0.0, %v998
  %1000 = vdwg.mxu0
  %v1001 = vadd.f32 %v245, %v999
  %v1002 = vxor.u32 %v1001, 2147483648
  %v1003 = vmul.f32 %v1002, 1.442695
  %v1004 = vpow.pop %v1003
  %v1005 = vadd.f32 %v1004, 1.0
  %v1006 = vrcp.pop %v1005
  %v1007 = vmul.f32 %v1005, %v1006
  %v1008 = vsub.f32 1.0, %v1007
  %v1009 = vmul.f32 %v1006, %v1008
  %v1010 = vadd.f32 %v1006, %v1009
  %vm1011 = vweird.f32 %v1005
  %vm1012 = vweird.f32 %v1006
  %vm1013 = vmor %vm1011, %vm1012
  %v1014 = vsel %vm1013, %v1006, %v1010
  %v1015 = vand.u32 2147483647, %v1005
  %vm1016 = vcmp.eq.f32.partialorder %v1015, 8.507059e+37
  %v1017 = vand.u32 %v1005, 2147483648
  %v1018 = vor.u32 1.1754944e-38, %v1017
  %v1019 = vsel %vm1016, %v1018, %v1014
  %v1020 = vmul.f32 1.0, %v1019
  %v1021 = vadd.f32 %v999, %v304
  %1023 = vrot.lane.b32.xlu0 %v1021, 64
  %v1024 = vpop.permute.xlu0 %1023
  %v1026 = vmul.f32 %v1020, %v1024
  %1028 = vrot.lane.b32.xlu0 %v1026, 64
  %v1029 = vpop.permute.xlu0 %1028
  %v1031 = vadd.f32 %v245, %v1029
  %v1032 = vtanh.pop %v1031
  %v1033 = vsub.f32 1.0, %v1020
  %1035 = vrot.lane.b32.xlu0 %v1032, 96
  %v1036 = vpop.permute.xlu0 %1035
  %v1038 = vmul.f32 %v1033, %v1036
  %v1039 = vmul.f32 %v1020, %v975
  %v1040 = vadd.f32 %v1038, %v1039
  %1042 = vrot.lane.b32.xlu0 %v1040, 96
  %v1043 = vpop.permute.xlu0 %1042
  %v1044 = vsel %vm259, %v1043, 0
  %1046 = vmatpush.msra.mxu0 0.0
  %1047 = vmatpush.msra.mxu0 0.0
  %1048 = vmatpush.msra.mxu0 0.0
  %1049 = vmatpush.msra.mxu0 0.0
  %1050 = vmatpush.msra.mxu0 0.0
  %1051 = vmatpush.msra.mxu0 0.0
  %1052 = vmatpush.msra.mxu0 0.0
  %1053 = vmatpush.msra.mxu0 0.0
  %1054 = vmatpush.msra.mxu0 0.0
  %1055 = vmatpush.msra.mxu0 0.0
  %1056 = vmatpush.msra.mxu0 0.0
  %1057 = vmatpush.msra.mxu0 0.0
  %1058 = vmatpush.msra.mxu0 %v59
  %1059 = vmatpush.msra.mxu0 %v58
  %1060 = vmatpush.msra.mxu0 %v57
  %1061 = vmatpush.msra.mxu0 %v56
  %1062 = vmatmul.f32.gmra.mxu0 %v1044
  %v1063 = vpop.f32.mrf.mxu0
  %v1064 = vadd.f32 0.0, %v1063
  %1065 = vdwg.mxu0
  %v1066 = vadd.f32 %v248, %v1064
  %v1067 = vxor.u32 %v1066, 2147483648
  %v1068 = vmul.f32 %v1067, 1.442695
  %v1069 = vpow.pop %v1068
  %v1070 = vadd.f32 %v1069, 1.0
  %v1071 = vrcp.pop %v1070
  %v1072 = vmul.f32 %v1070, %v1071
  %v1073 = vsub.f32 1.0, %v1072
  %v1074 = vmul.f32 %v1071, %v1073
  %v1075 = vadd.f32 %v1071, %v1074
  %vm1076 = vweird.f32 %v1070
  %vm1077 = vweird.f32 %v1071
  %vm1078 = vmor %vm1076, %vm1077
  %v1079 = vsel %vm1078, %v1071, %v1075
  %v1080 = vand.u32 2147483647, %v1070
  %vm1081 = vcmp.eq.f32.partialorder %v1080, 8.507059e+37
  %v1082 = vand.u32 %v1070, 2147483648
  %v1083 = vor.u32 1.1754944e-38, %v1082
  %v1084 = vsel %vm1081, %v1083, %v1079
  %v1085 = vmul.f32 1.0, %v1084
  %v1086 = vadd.f32 %v1064, %v304
  %1088 = vrot.lane.b32.xlu0 %v1086, 64
  %v1089 = vpop.permute.xlu0 %1088
  %v1091 = vmul.f32 %v1085, %v1089
  %1093 = vrot.lane.b32.xlu0 %v1091, 64
  %v1094 = vpop.permute.xlu0 %1093
  %v1096 = vadd.f32 %v248, %v1094
  %v1097 = vtanh.pop %v1096
  %v1098 = vsub.f32 1.0, %v1085
  %1100 = vrot.lane.b32.xlu0 %v1097, 96
  %v1101 = vpop.permute.xlu0 %1100
  %v1103 = vmul.f32 %v1098, %v1101
  %v1104 = vmul.f32 %v1085, %v1040
  %v1105 = vadd.f32 %v1103, %v1104
  %1107 = vrot.lane.b32.xlu0 %v1105, 96
  %v1108 = vpop.permute.xlu0 %1107
  %v1109 = vsel %vm259, %v1108, 0
  %1111 = vmatpush.msra.mxu0 0.0
  %1112 = vmatpush.msra.mxu0 0.0
  %1113 = vmatpush.msra.mxu0 0.0
  %1114 = vmatpush.msra.mxu0 0.0
  %1115 = vmatpush.msra.mxu0 0.0
  %1116 = vmatpush.msra.mxu0 0.0
  %1117 = vmatpush.msra.mxu0 0.0
  %1118 = vmatpush.msra.mxu0 0.0
  %1119 = vmatpush.msra.mxu0 0.0
  %1120 = vmatpush.msra.mxu0 0.0
  %1121 = vmatpush.msra.mxu0 0.0
  %1122 = vmatpush.msra.mxu0 0.0
  %1123 = vmatpush.msra.mxu0 %v59
  %1124 = vmatpush.msra.mxu0 %v58
  %1125 = vmatpush.msra.mxu0 %v57
  %1126 = vmatpush.msra.mxu0 %v56
  %1127 = vmatmul.f32.gmra.mxu0 %v1109
  %v1128 = vpop.f32.mrf.mxu0
  %v1129 = vadd.f32 0.0, %v1128
  %1130 = vdwg.mxu0
  %v1131 = vadd.f32 %v251, %v1129
  %v1132 = vxor.u32 %v1131, 2147483648
  %v1133 = vmul.f32 %v1132, 1.442695
  %v1134 = vpow.pop %v1133
  %v1135 = vadd.f32 %v1134, 1.0
  %v1136 = vrcp.pop %v1135
  %v1137 = vmul.f32 %v1135, %v1136
  %v1138 = vsub.f32 1.0, %v1137
  %v1139 = vmul.f32 %v1136, %v1138
  %v1140 = vadd.f32 %v1136, %v1139
  %vm1141 = vweird.f32 %v1135
  %vm1142 = vweird.f32 %v1136
  %vm1143 = vmor %vm1141, %vm1142
  %v1144 = vsel %vm1143, %v1136, %v1140
  %v1145 = vand.u32 2147483647, %v1135
  %vm1146 = vcmp.eq.f32.partialorder %v1145, 8.507059e+37
  %v1147 = vand.u32 %v1135, 2147483648
  %v1148 = vor.u32 1.1754944e-38, %v1147
  %v1149 = vsel %vm1146, %v1148, %v1144
  %v1150 = vmul.f32 1.0, %v1149
  %v1151 = vadd.f32 %v1129, %v304
  %1153 = vrot.lane.b32.xlu0 %v1151, 64
  %v1154 = vpop.permute.xlu0 %1153
  %v1156 = vmul.f32 %v1150, %v1154
  %1158 = vrot.lane.b32.xlu0 %v1156, 64
  %v1159 = vpop.permute.xlu0 %1158
  %v1161 = vadd.f32 %v251, %v1159
  %v1162 = vtanh.pop %v1161
  %v1163 = vsub.f32 1.0, %v1150
  %1165 = vrot.lane.b32.xlu0 %v1162, 96
  %v1166 = vpop.permute.xlu0 %1165
  %v1168 = vmul.f32 %v1163, %v1166
  %v1169 = vmul.f32 %v1150, %v1105
  %v1170 = vadd.f32 %v1168, %v1169
  %1172 = vrot.lane.b32.xlu0 %v1170, 96
  %v1173 = vpop.permute.xlu0 %1172
  %v1174 = vsel %vm259, %v1173, 0
  %1176 = vmatpush.msra.mxu0 0.0
  %1177 = vmatpush.msra.mxu0 0.0
  %1178 = vmatpush.msra.mxu0 0.0
  %1179 = vmatpush.msra.mxu0 0.0
  %1180 = vmatpush.msra.mxu0 0.0
  %1181 = vmatpush.msra.mxu0 0.0
  %1182 = vmatpush.msra.mxu0 0.0
  %1183 = vmatpush.msra.mxu0 0.0
  %1184 = vmatpush.msra.mxu0 0.0
  %1185 = vmatpush.msra.mxu0 0.0
  %1186 = vmatpush.msra.mxu0 0.0
  %1187 = vmatpush.msra.mxu0 0.0
  %1188 = vmatpush.msra.mxu0 %v59
  %1189 = vmatpush.msra.mxu0 %v58
  %1190 = vmatpush.msra.mxu0 %v57
  %1191 = vmatpush.msra.mxu0 %v56
  %1192 = vmatmul.f32.gmra.mxu0 %v1174
  %v1193 = vpop.f32.mrf.mxu0
  %v1194 = vadd.f32 0.0, %v1193
  %1195 = vdwg.mxu0
  %v1196 = vadd.f32 %v254, %v1194
  %v1197 = vxor.u32 %v1196, 2147483648
  %v1198 = vmul.f32 %v1197, 1.442695
  %v1199 = vpow.pop %v1198
  %v1200 = vadd.f32 %v1199, 1.0
  %v1201 = vrcp.pop %v1200
  %v1202 = vmul.f32 %v1200, %v1201
  %v1203 = vsub.f32 1.0, %v1202
  %v1204 = vmul.f32 %v1201, %v1203
  %v1205 = vadd.f32 %v1201, %v1204
  %vm1206 = vweird.f32 %v1200
  %vm1207 = vweird.f32 %v1201
  %vm1208 = vmor %vm1206, %vm1207
  %v1209 = vsel %vm1208, %v1201, %v1205
  %v1210 = vand.u32 2147483647, %v1200
  %vm1211 = vcmp.eq.f32.partialorder %v1210, 8.507059e+37
  %v1212 = vand.u32 %v1200, 2147483648
  %v1213 = vor.u32 1.1754944e-38, %v1212
  %v1214 = vsel %vm1211, %v1213, %v1209
  %v1215 = vmul.f32 1.0, %v1214
  %v1216 = vadd.f32 %v1194, %v304
  %1218 = vrot.lane.b32.xlu0 %v1216, 64
  %v1219 = vpop.permute.xlu0 %1218
  %v1221 = vmul.f32 %v1215, %v1219
  %1223 = vrot.lane.b32.xlu0 %v1221, 64
  %v1224 = vpop.permute.xlu0 %1223
  %v1226 = vadd.f32 %v254, %v1224
  %v1227 = vtanh.pop %v1226
  %v1228 = vsub.f32 1.0, %v1215
  %1230 = vrot.lane.b32.xlu0 %v1227, 96
  %v1231 = vpop.permute.xlu0 %1230
  %v1233 = vmul.f32 %v1228, %v1231
  %v1234 = vmul.f32 %v1215, %v1170
  %v1235 = vadd.f32 %v1233, %v1234
  %1237 = vrot.lane.b32.xlu0 %v1235, 96
  %v1238 = vpop.permute.xlu0 %1237
  %v1239 = vsel %vm259, %v1238, 0
  %1241 = vmatpush.msra.mxu0 0.0
  %1242 = vmatpush.msra.mxu0 0.0
  %1243 = vmatpush.msra.mxu0 0.0
  %1244 = vmatpush.msra.mxu0 0.0
  %1245 = vmatpush.msra.mxu0 0.0
  %1246 = vmatpush.msra.mxu0 0.0
  %1247 = vmatpush.msra.mxu0 0.0
  %1248 = vmatpush.msra.mxu0 0.0
  %1249 = vmatpush.msra.mxu0 0.0
  %1250 = vmatpush.msra.mxu0 0.0
  %1251 = vmatpush.msra.mxu0 0.0
  %1252 = vmatpush.msra.mxu0 0.0
  %1253 = vmatpush.msra.mxu0 %v59
  %1254 = vmatpush.msra.mxu0 %v58
  %1255 = vmatpush.msra.mxu0 %v57
  %1256 = vmatpush.msra.mxu0 %v56
  %1257 = vmatmul.f32.gmra.mxu0 %v1239
  %v1258 = vpop.f32.mrf.mxu0
  %v1259 = vadd.f32 0.0, %v1258
  %1260 = vdwg.mxu0
  %v1261 = vadd.f32 %v257, %v1259
  %v1262 = vxor.u32 %v1261, 2147483648
  %v1263 = vmul.f32 %v1262, 1.442695
  %v1264 = vpow.pop %v1263
  %v1265 = vadd.f32 %v1264, 1.0
  %v1266 = vrcp.pop %v1265
  %v1267 = vmul.f32 %v1265, %v1266
  %v1268 = vsub.f32 1.0, %v1267
  %v1269 = vmul.f32 %v1266, %v1268
  %v1270 = vadd.f32 %v1266, %v1269
  %vm1271 = vweird.f32 %v1265
  %vm1272 = vweird.f32 %v1266
  %vm1273 = vmor %vm1271, %vm1272
  %v1274 = vsel %vm1273, %v1266, %v1270
  %v1275 = vand.u32 2147483647, %v1265
  %vm1276 = vcmp.eq.f32.partialorder %v1275, 8.507059e+37
  %v1277 = vand.u32 %v1265, 2147483648
  %v1278 = vor.u32 1.1754944e-38, %v1277
  %v1279 = vsel %vm1276, %v1278, %v1274
  %v1280 = vmul.f32 1.0, %v1279
  %v1281 = vadd.f32 %v1259, %v304
  %1283 = vrot.lane.b32.xlu0 %v1281, 64
  %v1284 = vpop.permute.xlu0 %1283
  %v1286 = vmul.f32 %v1280, %v1284
  %1288 = vrot.lane.b32.xlu0 %v1286, 64
  %v1289 = vpop.permute.xlu0 %1288
  %v1291 = vadd.f32 %v257, %v1289
  %v1292 = vtanh.pop %v1291
  %v1293 = vsub.f32 1.0, %v1280
  %1295 = vrot.lane.b32.xlu0 %v1292, 96
  %v1296 = vpop.permute.xlu0 %1295
  %v1298 = vmul.f32 %v1293, %v1296
  %v1299 = vmul.f32 %v1280, %v1235
  %v1300 = vadd.f32 %v1298, %v1299
  %v1302 = vperm.slane %v65, 0
  %v1303 = vperm.slane %v65, 1
  %1307 = vrot.lane.b32.xlu0 %v1300, 96
  %v1308 = vpop.permute.xlu0 %1307
  %v1309 = vsel %vm259, %v1308, 0
  %1311 = vmatpush.msra.mxu0 0.0
  %1312 = vmatpush.msra.mxu0 0.0
  %1313 = vmatpush.msra.mxu0 0.0
  %1314 = vmatpush.msra.mxu0 0.0
  %1315 = vmatpush.msra.mxu0 0.0
  %1316 = vmatpush.msra.mxu0 0.0
  %1317 = vmatpush.msra.mxu0 0.0
  %1318 = vmatpush.msra.mxu0 0.0
  %1319 = vmatpush.msra.mxu0 0.0
  %1320 = vmatpush.msra.mxu0 0.0
  %1321 = vmatpush.msra.mxu0 0.0
  %1322 = vmatpush.msra.mxu0 0.0
  %1323 = vmatpush.msra.mxu0 %v59
  %1324 = vmatpush.msra.mxu0 %v58
  %1325 = vmatpush.msra.mxu0 %v57
  %1326 = vmatpush.msra.mxu0 %v56
  %1327 = vmatmul.f32.gmra.mxu0 %v1109
  %v1328 = vpop.f32.mrf.mxu0
  %v1329 = vadd.f32 %v1302, %v1328
  %1330 = vmatmul.f32.gmra.mxu0 %v1174
  %v1331 = vpop.f32.mrf.mxu0
  %v1332 = vadd.f32 %v1302, %v1331
  %1333 = vmatmul.f32.gmra.mxu0 %v1239
  %v1334 = vpop.f32.mrf.mxu0
  %v1335 = vadd.f32 %v1302, %v1334
  %1336 = vmatmul.f32.gmra.mxu0 %v1309
  %v1337 = vpop.f32.mrf.mxu0
  %v1338 = vadd.f32 %v1302, %v1337
  %1339 = vdwg.mxu0
  %1340 = vmatpush.msra.mxu0 0.0
  %1341 = vmatpush.msra.mxu0 0.0
  %1342 = vmatpush.msra.mxu0 0.0
  %1343 = vmatpush.msra.mxu0 0.0
  %1344 = vmatpush.msra.mxu0 0.0
  %1345 = vmatpush.msra.mxu0 0.0
  %1346 = vmatpush.msra.mxu0 0.0
  %1347 = vmatpush.msra.mxu0 0.0
  %1348 = vmatpush.msra.mxu0 0.0
  %1349 = vmatpush.msra.mxu0 0.0
  %1350 = vmatpush.msra.mxu0 0.0
  %1351 = vmatpush.msra.mxu0 0.0
  %1352 = vmatpush.msra.mxu0 %v63
  %1353 = vmatpush.msra.mxu0 %v62
  %1354 = vmatpush.msra.mxu0 %v61
  %1355 = vmatpush.msra.mxu0 %v60
  %1356 = vmatmul.f32.gmra.mxu0 %v1109
  %v1357 = vpop.f32.mrf.mxu0
  %v1358 = vadd.f32 %v1303, %v1357
  %1359 = vmatmul.f32.gmra.mxu0 %v1174
  %v1360 = vpop.f32.mrf.mxu0
  %v1361 = vadd.f32 %v1303, %v1360
  %1362 = vmatmul.f32.gmra.mxu0 %v1239
  %v1363 = vpop.f32.mrf.mxu0
  %v1364 = vadd.f32 %v1303, %v1363
  %1365 = vmatmul.f32.gmra.mxu0 %v1309
  %v1366 = vpop.f32.mrf.mxu0
  %v1367 = vadd.f32 %v1303, %v1366
  %1368 = vdwg.mxu0
  %1373 = vrot.lane.b32.xlu0 %v1329, 96
  %v1374 = vpop.permute.xlu0 %1373
  %1375 = vrot.lane.b32.xlu0 %v1332, 96
  %v1376 = vpop.permute.xlu0 %1375
  %1377 = vrot.lane.b32.xlu0 %v1335, 96
  %v1378 = vpop.permute.xlu0 %1377
  %1379 = vrot.lane.b32.xlu0 %v1338, 96
  %v1380 = vpop.permute.xlu0 %1379
  %v1385 = vadd.f32 %v1329, %v1374
  %v1386 = vadd.f32 %v1332, %v1376
  %v1387 = vadd.f32 %v1335, %v1378
  %v1388 = vadd.f32 %v1338, %v1380
  %v1389 = vxor.u32 %v1385, 2147483648
  %v1390 = vxor.u32 %v1386, 2147483648
  %v1391 = vxor.u32 %v1387, 2147483648
  %v1392 = vxor.u32 %v1388, 2147483648
  %v1393 = vmul.f32 %v1389, 1.442695
  %v1394 = vpow.pop %v1393
  %v1395 = vmul.f32 %v1390, 1.442695
  %v1396 = vpow.pop %v1395
  %v1397 = vmul.f32 %v1391, 1.442695
  %v1398 = vpow.pop %v1397
  %v1399 = vmul.f32 %v1392, 1.442695
  %v1400 = vpow.pop %v1399
  %v1401 = vadd.f32 %v1394, 1.0
  %v1402 = vadd.f32 %v1396, 1.0
  %v1403 = vadd.f32 %v1398, 1.0
  %v1404 = vadd.f32 %v1400, 1.0
  %v1405 = vrcp.pop %v1401
  %v1406 = vmul.f32 %v1401, %v1405
  %v1407 = vsub.f32 1.0, %v1406
  %v1408 = vmul.f32 %v1405, %v1407
  %v1409 = vadd.f32 %v1405, %v1408
  %vm1410 = vweird.f32 %v1401
  %vm1411 = vweird.f32 %v1405
  %vm1412 = vmor %vm1410, %vm1411
  %v1413 = vsel %vm1412, %v1405, %v1409
  %v1414 = vand.u32 2147483647, %v1401
  %vm1415 = vcmp.eq.f32.partialorder %v1414, 8.507059e+37
  %v1416 = vand.u32 %v1401, 2147483648
  %v1417 = vor.u32 1.1754944e-38, %v1416
  %v1418 = vsel %vm1415, %v1417, %v1413
  %v1419 = vmul.f32 1.0, %v1418
  %v1420 = vrcp.pop %v1402
  %v1421 = vmul.f32 %v1402, %v1420
  %v1422 = vsub.f32 1.0, %v1421
  %v1423 = vmul.f32 %v1420, %v1422
  %v1424 = vadd.f32 %v1420, %v1423
  %vm1425 = vweird.f32 %v1402
  %vm1426 = vweird.f32 %v1420
  %vm1427 = vmor %vm1425, %vm1426
  %v1428 = vsel %vm1427, %v1420, %v1424
  %v1429 = vand.u32 2147483647, %v1402
  %vm1430 = vcmp.eq.f32.partialorder %v1429, 8.507059e+37
  %v1431 = vand.u32 %v1402, 2147483648
  %v1432 = vor.u32 1.1754944e-38, %v1431
  %v1433 = vsel %vm1430, %v1432, %v1428
  %v1434 = vmul.f32 1.0, %v1433
  %v1435 = vrcp.pop %v1403
  %v1436 = vmul.f32 %v1403, %v1435
  %v1437 = vsub.f32 1.0, %v1436
  %v1438 = vmul.f32 %v1435, %v1437
  %v1439 = vadd.f32 %v1435, %v1438
  %vm1440 = vweird.f32 %v1403
  %vm1441 = vweird.f32 %v1435
  %vm1442 = vmor %vm1440, %vm1441
  %v1443 = vsel %vm1442, %v1435, %v1439
  %v1444 = vand.u32 2147483647, %v1403
  %vm1445 = vcmp.eq.f32.partialorder %v1444, 8.507059e+37
  %v1446 = vand.u32 %v1403, 2147483648
  %v1447 = vor.u32 1.1754944e-38, %v1446
  %v1448 = vsel %vm1445, %v1447, %v1443
  %v1449 = vmul.f32 1.0, %v1448
  %v1450 = vrcp.pop %v1404
  %v1451 = vmul.f32 %v1404, %v1450
  %v1452 = vsub.f32 1.0, %v1451
  %v1453 = vmul.f32 %v1450, %v1452
  %v1454 = vadd.f32 %v1450, %v1453
  %vm1455 = vweird.f32 %v1404
  %vm1456 = vweird.f32 %v1450
  %vm1457 = vmor %vm1455, %vm1456
  %v1458 = vsel %vm1457, %v1450, %v1454
  %v1459 = vand.u32 2147483647, %v1404
  %vm1460 = vcmp.eq.f32.partialorder %v1459, 8.507059e+37
  %v1461 = vand.u32 %v1404, 2147483648
  %v1462 = vor.u32 1.1754944e-38, %v1461
  %v1463 = vsel %vm1460, %v1462, %v1458
  %v1464 = vmul.f32 1.0, %v1463
  %v1465 = vadd.f32 %v1358, %v1374
  %v1466 = vadd.f32 %v1361, %v1376
  %v1467 = vadd.f32 %v1364, %v1378
  %v1468 = vadd.f32 %v1367, %v1380
  %v1469 = vxor.u32 %v1465, 2147483648
  %v1470 = vxor.u32 %v1466, 2147483648
  %v1471 = vxor.u32 %v1467, 2147483648
  %v1472 = vxor.u32 %v1468, 2147483648
  %v1473 = vmul.f32 %v1469, 1.442695
  %v1474 = vpow.pop %v1473
  %v1475 = vmul.f32 %v1470, 1.442695
  %v1476 = vpow.pop %v1475
  %v1477 = vmul.f32 %v1471, 1.442695
  %v1478 = vpow.pop %v1477
  %v1479 = vmul.f32 %v1472, 1.442695
  %v1480 = vpow.pop %v1479
  %v1481 = vadd.f32 %v1474, 1.0
  %v1482 = vadd.f32 %v1476, 1.0
  %v1483 = vadd.f32 %v1478, 1.0
  %v1484 = vadd.f32 %v1480, 1.0
  %v1485 = vrcp.pop %v1481
  %v1486 = vmul.f32 %v1481, %v1485
  %v1487 = vsub.f32 1.0, %v1486
  %v1488 = vmul.f32 %v1485, %v1487
  %v1489 = vadd.f32 %v1485, %v1488
  %vm1490 = vweird.f32 %v1481
  %vm1491 = vweird.f32 %v1485
  %vm1492 = vmor %vm1490, %vm1491
  %v1493 = vsel %vm1492, %v1485, %v1489
  %v1494 = vand.u32 2147483647, %v1481
  %vm1495 = vcmp.eq.f32.partialorder %v1494, 8.507059e+37
  %v1496 = vand.u32 %v1481, 2147483648
  %v1497 = vor.u32 1.1754944e-38, %v1496
  %v1498 = vsel %vm1495, %v1497, %v1493
  %v1499 = vmul.f32 1.0, %v1498
  %v1500 = vrcp.pop %v1482
  %v1501 = vmul.f32 %v1482, %v1500
  %v1502 = vsub.f32 1.0, %v1501
  %v1503 = vmul.f32 %v1500, %v1502
  %v1504 = vadd.f32 %v1500, %v1503
  %vm1505 = vweird.f32 %v1482
  %vm1506 = vweird.f32 %v1500
  %vm1507 = vmor %vm1505, %vm1506
  %v1508 = vsel %vm1507, %v1500, %v1504
  %v1509 = vand.u32 2147483647, %v1482
  %vm1510 = vcmp.eq.f32.partialorder %v1509, 8.507059e+37
  %v1511 = vand.u32 %v1482, 2147483648
  %v1512 = vor.u32 1.1754944e-38, %v1511
  %v1513 = vsel %vm1510, %v1512, %v1508
  %v1514 = vmul.f32 1.0, %v1513
  %v1515 = vrcp.pop %v1483
  %v1516 = vmul.f32 %v1483, %v1515
  %v1517 = vsub.f32 1.0, %v1516
  %v1518 = vmul.f32 %v1515, %v1517
  %v1519 = vadd.f32 %v1515, %v1518
  %vm1520 = vweird.f32 %v1483
  %vm1521 = vweird.f32 %v1515
  %vm1522 = vmor %vm1520, %vm1521
  %v1523 = vsel %vm1522, %v1515, %v1519
  %v1524 = vand.u32 2147483647, %v1483
  %vm1525 = vcmp.eq.f32.partialorder %v1524, 8.507059e+37
  %v1526 = vand.u32 %v1483, 2147483648
  %v1527 = vor.u32 1.1754944e-38, %v1526
  %v1528 = vsel %vm1525, %v1527, %v1523
  %v1529 = vmul.f32 1.0, %v1528
  %v1530 = vrcp.pop %v1484
  %v1531 = vmul.f32 %v1484, %v1530
  %v1532 = vsub.f32 1.0, %v1531
  %v1533 = vmul.f32 %v1530, %v1532
  %v1534 = vadd.f32 %v1530, %v1533
  %vm1535 = vweird.f32 %v1484
  %vm1536 = vweird.f32 %v1530
  %vm1537 = vmor %vm1535, %vm1536
  %v1538 = vsel %vm1537, %v1530, %v1534
  %v1539 = vand.u32 2147483647, %v1484
  %vm1540 = vcmp.eq.f32.partialorder %v1539, 8.507059e+37
  %v1541 = vand.u32 %v1484, 2147483648
  %v1542 = vor.u32 1.1754944e-38, %v1541
  %v1543 = vsel %vm1540, %v1542, %v1538
  %v1544 = vmul.f32 1.0, %v1543
  %1545 = vrot.lane.b32.xlu0 %v1329, 32
  %v1546 = vpop.permute.xlu0 %1545
  %1547 = vrot.lane.b32.xlu0 %v1332, 32
  %v1548 = vpop.permute.xlu0 %1547
  %1549 = vrot.lane.b32.xlu0 %v1335, 32
  %v1550 = vpop.permute.xlu0 %1549
  %1551 = vrot.lane.b32.xlu0 %v1338, 32
  %v1552 = vpop.permute.xlu0 %1551
  %v1557 = vmul.f32 %v1419, %v1546
  %v1558 = vmul.f32 %v1434, %v1548
  %v1559 = vmul.f32 %v1449, %v1550
  %v1560 = vmul.f32 %v1464, %v1552
  %1565 = vrot.lane.b32.xlu0 %v1557, 64
  %v1566 = vpop.permute.xlu0 %1565
  %1567 = vrot.lane.b32.xlu0 %v1558, 64
  %v1568 = vpop.permute.xlu0 %1567
  %1569 = vrot.lane.b32.xlu0 %v1559, 64
  %v1570 = vpop.permute.xlu0 %1569
  %1571 = vrot.lane.b32.xlu0 %v1560, 64
  %v1572 = vpop.permute.xlu0 %1571
  %v1577 = vadd.f32 %v1358, %v1566
  %v1578 = vadd.f32 %v1361, %v1568
  %v1579 = vadd.f32 %v1364, %v1570
  %v1580 = vadd.f32 %v1367, %v1572
  %v1581 = vtanh.pop %v1577
  %v1582 = vtanh.pop %v1578
  %v1583 = vtanh.pop %v1579
  %v1584 = vtanh.pop %v1580
  %v1585 = vsub.f32 1.0, %v1499
  %v1586 = vsub.f32 1.0, %v1514
  %v1587 = vsub.f32 1.0, %v1529
  %v1588 = vsub.f32 1.0, %v1544
  %1593 = vrot.lane.b32.xlu0 %v1581, 96
  %v1594 = vpop.permute.xlu0 %1593
  %1595 = vrot.lane.b32.xlu0 %v1582, 96
  %v1596 = vpop.permute.xlu0 %1595
  %1597 = vrot.lane.b32.xlu0 %v1583, 96
  %v1598 = vpop.permute.xlu0 %1597
  %1599 = vrot.lane.b32.xlu0 %v1584, 96
  %v1600 = vpop.permute.xlu0 %1599
  %v1605 = vmul.f32 %v1585, %v1594
  %v1606 = vmul.f32 %v1586, %v1596
  %v1607 = vmul.f32 %v1587, %v1598
  %v1608 = vmul.f32 %v1588, %v1600
  %v1613 = vmul.f32 %v1499, %v1108
  %v1614 = vmul.f32 %v1514, %v1173
  %v1615 = vmul.f32 %v1529, %v1238
  %v1616 = vmul.f32 %v1544, %v1308
  %v1617 = vadd.f32 %v1605, %v1613
  %v1618 = vadd.f32 %v1606, %v1614
  %v1619 = vadd.f32 %v1607, %v1615
  %v1620 = vadd.f32 %v1608, %v1616
  %v1622 = vperm.slane %v66, 0
  %1627 = vrot.lane.b32.xlu0 %v60, 64
  %v1628 = vpop.permute.xlu0 %1627
  %1629 = vrot.lane.b32.xlu0 %v61, 64
  %v1630 = vpop.permute.xlu0 %1629
  %1631 = vrot.lane.b32.xlu0 %v62, 64
  %v1632 = vpop.permute.xlu0 %1631
  %1633 = vrot.lane.b32.xlu0 %v63, 64
  %v1634 = vpop.permute.xlu0 %1633
  %1639 = vrot.lane.b32.xlu0 %v1622, 64
  %v1640 = vpop.permute.xlu0 %1639
  %v1643 = vsel %vm259, %v1617, 0
  %v1646 = vsel %vm259, %v1618, 0
  %v1649 = vsel %vm259, %v1619, 0
  %v1652 = vsel %vm259, %v1620, 0
  %1654 = vmatpush.msra.mxu0 0.0
  %1655 = vmatpush.msra.mxu0 0.0
  %1656 = vmatpush.msra.mxu0 0.0
  %1657 = vmatpush.msra.mxu0 0.0
  %1658 = vmatpush.msra.mxu0 0.0
  %1659 = vmatpush.msra.mxu0 0.0
  %1660 = vmatpush.msra.mxu0 0.0
  %1661 = vmatpush.msra.mxu0 0.0
  %1662 = vmatpush.msra.mxu0 0.0
  %1663 = vmatpush.msra.mxu0 0.0
  %1664 = vmatpush.msra.mxu0 0.0
  %1665 = vmatpush.msra.mxu0 0.0
  %1666 = vmatpush.msra.mxu0 %v1634
  %1667 = vmatpush.msra.mxu0 %v1632
  %1668 = vmatpush.msra.mxu0 %v1630
  %1669 = vmatpush.msra.mxu0 %v1628
  %1670 = vmatmul.f32.gmra.mxu0 %v1643
  %v1671 = vpop.f32.mrf.mxu0
  %v1672 = vadd.f32 %v1640, %v1671
  %1673 = vmatmul.f32.gmra.mxu0 %v1646
  %v1674 = vpop.f32.mrf.mxu0
  %v1675 = vadd.f32 %v1640, %v1674
  %1676 = vmatmul.f32.gmra.mxu0 %v1649
  %v1677 = vpop.f32.mrf.mxu0
  %v1678 = vadd.f32 %v1640, %v1677
  %1679 = vmatmul.f32.gmra.mxu0 %v1652
  %v1680 = vpop.f32.mrf.mxu0
  %v1681 = vadd.f32 %v1640, %v1680
  %1682 = vdwg.mxu0
  %1683 = vst.msk [vmem:[%s6] sm:$0xff] %vm75, %v1672
  %1684 = vst.msk [vmem:[%s6 + $0x8] sm:$0xff] %vm75, %v1675
  %1685 = vst.msk [vmem:[%s6 + $0x10] sm:$0xff] %vm75, %v1678
  %1686 = vst.msk [vmem:[%s6 + $0x18] sm:$0xff] %vm75, %v1681
  // Predicated region
  $region26: #{tpu_custom_call.1} parent=0 // pred_check
    _
  $region27: #{tpu_custom_call.1} parent=0 // pred_check_branch
    %1688 = sbr.rel (0) target = $region29
  $region28: #{tpu_custom_call.1} parent=0 // pred_region
    _
  $region29: #{tpu_custom_call.1} parent=0 // pred_fallthru
    _
  // Predicated region
  $region30: #{tpu_custom_call.1} parent=0 // pred_check
    _
  $region31: #{tpu_custom_call.1} parent=0 // pred_check_branch
    %1690 = sbr.rel (0) target = $region33
  $region32: #{tpu_custom_call.1} parent=0 // pred_region
    _
  $region33: #{tpu_custom_call.1} parent=0 // pred_fallthru
    _

</llo_original>
